<compile_context>
chip_gen: v7x
topology: tpu7x:2x2x1
jax: 0.10.0
libtpu: 0.0.40
codegen_flags: <defaults>
</compile_context>

<pallas_src>
import functools

import jax
import jax.numpy as jnp
from jax.experimental import pallas as pl
from jax.experimental.pallas import tpu as pltpu

NEG_SLOPE = 0.01   # PyTorch LeakyReLU default
_ROW_ALIGN = 16    # sublane multiple valid for both f32 (8) and bf16 (16) tiles


def _leaky_relu(x):
    return jnp.where(x >= 0, x, NEG_SLOPE * x)


def _round_up(x, m):
    return (x + m - 1) // m * m


def ff_kernel(x_ref, w1s_ref, b_ref, w2_ref, w3_ref, o_ref, *,
              d_pad, compute_dtype, precision):
    """One (bm, Dp) row tile of
         out = LReLU(LReLU(LReLU(x@W1+b1)@W2+b2)@W3+b3) + (x@Ws+bs)
    with the shortcut GEMM fused into the first one (W1s = [W1 | Ws]) and all
    biases packed into a single (1, 4*Dp) vector [b1 | bs | b2 | b3]."""
    x = x_ref[...].astype(compute_dtype)

    # Fused first layer + shortcut: (bm, Dp) @ (Dp, 2*Dp), f32 accumulation.
    y = jnp.dot(x, w1s_ref[...], preferred_element_type=jnp.float32,
                precision=precision) + b_ref[:, :2 * d_pad]
    # Keep long-lived values in compute_dtype so the f32 GEMM result is not
    # live across the following two matmuls (cuts VMEM/spill on v7x).
    h = _leaky_relu(y[:, :d_pad]).astype(compute_dtype)
    shortcut = y[:, d_pad:].astype(compute_dtype)

    h = jnp.dot(h, w2_ref[...], preferred_element_type=jnp.float32,
                precision=precision) + b_ref[:, 2 * d_pad:3 * d_pad]
    h = _leaky_relu(h).astype(compute_dtype)

    h = jnp.dot(h, w3_ref[...], preferred_element_type=jnp.float32,
                precision=precision) + b_ref[:, 3 * d_pad:]
    h = _leaky_relu(h)

    o_ref[...] = (h + shortcut.astype(jnp.float32)).astype(o_ref.dtype)


def _vmem_budget_bytes():
    """Physical per-core VMEM minus ~12.5% headroom for Mosaic scratch/sems."""
    try:
        cap = int(pltpu.get_tpu_info().vmem_capacity_bytes)
    except Exception:
        cap = 64 * 1024 * 1024          # conservative fallback (v7x per-TC size)
    return cap - cap // 8               # ~56 MiB on v7x, ~112 MiB on v5e/v6e


def _choose_bm(m, dp, block_m, x_bytes, out_bytes, w_bytes, budget):
    bm = max(_ROW_ALIGN, _round_up(min(block_m, m), _ROW_ALIGN))
    # v7x megacore: dimension_semantics=("parallel",) shards row tiles across
    # the 2 TensorCores -> make sure there are >= 2 tiles whenever M allows.
    if pl.cdiv(m, bm) < 2 and m > _ROW_ALIGN:
        bm = _round_up(pl.cdiv(m, 2), _ROW_ALIGN)

    def vmem_estimate(bm_):
        weights = 4 * dp * dp * w_bytes + 4 * dp * 4     # single-buffered + biases
        io = 2 * bm_ * dp * (x_bytes + out_bytes)        # double-buffered x / out
        temps = 6 * bm_ * dp * 4                         # live f32 GEMM results
        return weights + io + temps

    while bm > _ROW_ALIGN and vmem_estimate(bm) > budget:
        bm = max(_ROW_ALIGN, _round_up(bm // 2, _ROW_ALIGN))
    return bm


@functools.partial(jax.jit, static_argnames=("block_m", "compute_dtype"))
def ff_forward(x, params, block_m=512, compute_dtype=jnp.bfloat16):
    """x: (M, D) float. params: weights (D, D) stored (in_dim, out_dim),
    biases (1, D).  Pass x in bf16 to halve streamed activation bytes in the
    HBM-bound regime (small/medium D); output dtype matches x.dtype."""
    M, D = x.shape

    # Lane-dense feature dim.  256-pad for large D (full-width v6e/v7x MXU),
    # 128-pad for small D (minimal HBM bytes; optimal on v5e).
    lane = 256 if D >= 1024 else 128
    Dp = _round_up(D, lane)

    x_bytes = jnp.dtype(x.dtype).itemsize
    w_bytes = jnp.dtype(compute_dtype).itemsize
    budget = _vmem_budget_bytes()
    bm = _choose_bm(M, Dp, block_m, x_bytes, x_bytes, w_bytes, budget)

    # Zero D-padding is exact: pad weight rows/cols and pad biases are 0 and
    # LeakyReLU(0)=0, so padded feature columns stay identically 0 everywhere.
    xp = x if Dp == D else jnp.pad(x, ((0, 0), (0, Dp - D)))

    def pad_w(w):
        return jnp.pad(w, ((0, Dp - D), (0, Dp - D))).astype(compute_dtype)

    def pad_b(b):
        return jnp.pad(b, ((0, 0), (0, Dp - D))).astype(jnp.float32)

    # Fuse the shortcut GEMM into the first one; pack all biases together.
    w1s = jnp.concatenate([pad_w(params["w1"]), pad_w(params["ws"])], axis=1)
    b_all = jnp.concatenate([pad_b(params["b1"]), pad_b(params["bs"]),
                             pad_b(params["b2"]), pad_b(params["b3"])], axis=1)
    w2 = pad_w(params["w2"])
    w3 = pad_w(params["w3"])

    grid = (pl.cdiv(M, bm),)   # partial last row tile handled by masked stores

    x_spec = pl.BlockSpec((bm, Dp), lambda i: (i, 0))
    o_spec = pl.BlockSpec((bm, Dp), lambda i: (i, 0))
    # Grid-invariant weights/biases: constant index_map + single buffering ->
    # fetched once, ONE resident VMEM copy across the whole row grid.
    single = pl.Buffered(1)
    w1s_spec = pl.BlockSpec((Dp, 2 * Dp), lambda i: (0, 0), pipeline_mode=single)
    b_spec = pl.BlockSpec((1, 4 * Dp), lambda i: (0, 0), pipeline_mode=single)
    w_spec = pl.BlockSpec((Dp, Dp), lambda i: (0, 0), pipeline_mode=single)

    cost = pl.CostEstimate(
        flops=2 * M * Dp * Dp * 4,                       # 4 DxD GEMMs of MACs
        transcendentals=0,
        bytes_accessed=(M * Dp * 2 * x_bytes             # x in + out
                        + 4 * Dp * Dp * w_bytes          # weights
                        + 4 * Dp * 4),                   # biases (f32)
    )

    precision = (jax.lax.Precision.HIGHEST
                 if jnp.dtype(compute_dtype) == jnp.dtype(jnp.float32) else None)
    kernel = functools.partial(ff_kernel, d_pad=Dp,
                               compute_dtype=compute_dtype, precision=precision)

    out = pl.pallas_call(
        kernel,
        out_shape=jax.ShapeDtypeStruct((M, Dp), x.dtype),
        grid_spec=pltpu.PrefetchScalarGridSpec(
            num_scalar_prefetch=0,
            grid=grid,
            in_specs=[x_spec, w1s_spec, b_spec, w_spec, w_spec],
            out_specs=o_spec,
        ),
        compiler_params=pltpu.CompilerParams(
            dimension_semantics=("parallel",),           # row tiles shard across TCs
            vmem_limit_bytes=budget),
        cost_estimate=cost,
    )(xp, w1s, b_all, w2, w3)

    return out if Dp == D else out[:, :D]


def init_ff_params(key, input_dim):
    """Deterministic init mimicking PyTorch nn.Linear (uniform +/- 1/sqrt(fan_in)).
    Weights stored as (in_dim, out_dim) (already transposed vs torch)."""
    bound = 1.0 / (input_dim ** 0.5)
    keys = jax.random.split(key, 8)

    def w(k):
        return jax.random.uniform(k, (input_dim, input_dim), jnp.float32,
                                  minval=-bound, maxval=bound)

    def b(k):
        return jax.random.uniform(k, (1, input_dim), jnp.float32,
                                  minval=-bound, maxval=bound)

    return {
        "w1": w(keys[0]), "b1": b(keys[1]),
        "w2": w(keys[2]), "b2": b(keys[3]),
        "w3": w(keys[4]), "b3": b(keys[5]),
        "ws": w(keys[6]), "bs": b(keys[7]),
    }


def ff_reference(x, p, precision=jax.lax.Precision.HIGHEST):
    """Pure-JAX reference reproducing the PyTorch forward (full f32 matmuls)."""
    def lin(a, w, b):
        return jnp.dot(a, w, precision=precision) + b
    h = _leaky_relu(lin(x, p["w1"], p["b1"]))
    h = _leaky_relu(lin(h, p["w2"], p["b2"]))
    h = _leaky_relu(lin(h, p["w3"], p["b3"]))
    return h + lin(x, p["ws"], p["bs"])


if __name__ == "__main__":
    key = jax.random.PRNGKey(0)
    k_x, k_p = jax.random.split(key)

    batch, input_dim = 8, 32
    x = jax.random.normal(k_x, (batch, input_dim), jnp.float32)
    params = init_ff_params(k_p, input_dim)

    ref = ff_reference(x, params)

    # f32 MXU path (precision=HIGHEST in-kernel): tight numerical check.
    out_f32 = jax.block_until_ready(ff_forward(x, params, compute_dtype=jnp.float32))
    assert out_f32.shape == (batch, input_dim)
    assert out_f32.dtype == jnp.float32
    assert jnp.allclose(out_f32, ref, atol=1e-5, rtol=1e-5), "f32 mismatch vs reference"

    # Fast path: bf16 streamed activations + bf16 weights, f32 accumulation.
    out_bf16 = jax.block_until_ready(ff_forward(x.astype(jnp.bfloat16), params))
    assert out_bf16.shape == (batch, input_dim)
    assert out_bf16.dtype == jnp.bfloat16
    assert jnp.allclose(out_bf16.astype(jnp.float32), ref, atol=5e-2, rtol=5e-2), \
        "bf16 mismatch vs reference"

    print("KERNEL_OK")
</pallas_src>

<mosaic_0001>
module attributes {stable_mosaic.version = 11 : i64} {
  func.func @ff_kernel(%arg0: i32, %arg1: memref<16x128xf32, #tpu.memory_space<vmem>>, %arg2: memref<128x256xf32, #tpu.memory_space<vmem>>, %arg3: memref<1x512xf32, #tpu.memory_space<vmem>>, %arg4: memref<128x128xf32, #tpu.memory_space<vmem>>, %arg5: memref<128x128xf32, #tpu.memory_space<vmem>>, %arg6: memref<16x128xf32, #tpu.memory_space<vmem>>) attributes {dimension_semantics = [#tpu.dimension_semantics<parallel>], iteration_bounds = array<i64: 1>, scalar_prefetch = 0 : i64, scratch_operands = 0 : i64, tpu.core_type = #tpu.core_type<tc>, window_params = [{transform_indices = @transform_0, window_bounds = array<i64: 16, 128>}, {pipeline_mode = #tpu.pipeline_mode<synchronous>, transform_indices = @transform_1, window_bounds = array<i64: 128, 256>}, {pipeline_mode = #tpu.pipeline_mode<synchronous>, transform_indices = @transform_2, window_bounds = array<i64: 1, 512>}, {pipeline_mode = #tpu.pipeline_mode<synchronous>, transform_indices = @transform_3, window_bounds = array<i64: 128, 128>}, {pipeline_mode = #tpu.pipeline_mode<synchronous>, transform_indices = @transform_4, window_bounds = array<i64: 128, 128>}, {transform_indices = @transform_5, window_bounds = array<i64: 16, 128>}]} {
    %c0 = arith.constant 0 : index
    %c0_0 = arith.constant 0 : index
    %0 = vector.load %arg1[%c0, %c0_0] : memref<16x128xf32, #tpu.memory_space<vmem>>, vector<16x128xf32>
    %c0_1 = arith.constant 0 : index
    %c0_2 = arith.constant 0 : index
    %1 = vector.load %arg2[%c0_1, %c0_2] : memref<128x256xf32, #tpu.memory_space<vmem>>, vector<128x256xf32>
    %cst = arith.constant dense<0.000000e+00> : vector<16x256xf32>
    %2 = tpu.matmul %0, %1, %cst {dimension_numbers = #tpu.dot_dimension_numbers<[1], [0], [0], [1], [0, 0, 1, 1], [], []>, precision = #tpu.contract_precision<fp32>} : vector<16x128xf32>, vector<128x256xf32>, vector<16x256xf32> -> vector<16x256xf32>
    %c0_3 = arith.constant 0 : index
    %c0_4 = arith.constant 0 : index
    %3 = vector.load %arg3[%c0_3, %c0_4] : memref<1x512xf32, #tpu.memory_space<vmem>>, vector<1x256xf32>
    %4 = vector.broadcast %3 : vector<1x256xf32> to vector<16x256xf32>
    %5 = arith.addf %2, %4 : vector<16x256xf32>
    %6 = vector.extract_strided_slice %5 {offsets = [0, 0], sizes = [16, 128], strides = [1, 1]} : vector<16x256xf32> to vector<16x128xf32>
    %cst_5 = arith.constant 0.000000e+00 : f32
    %7 = vector.broadcast %cst_5 : f32 to vector<16x128xf32>
    %8 = arith.cmpf oge, %6, %7 : vector<16x128xf32>
    %cst_6 = arith.constant 0.00999999977 : f32
    %9 = vector.broadcast %cst_6 : f32 to vector<16x128xf32>
    %10 = arith.mulf %9, %6 : vector<16x128xf32>
    %11 = arith.select %8, %6, %10 : vector<16x128xi1>, vector<16x128xf32>
    %12 = vector.extract_strided_slice %5 {offsets = [0, 128], sizes = [16, 128], strides = [1, 1]} : vector<16x256xf32> to vector<16x128xf32>
    %c0_7 = arith.constant 0 : index
    %c0_8 = arith.constant 0 : index
    %13 = vector.load %arg4[%c0_7, %c0_8] : memref<128x128xf32, #tpu.memory_space<vmem>>, vector<128x128xf32>
    %cst_9 = arith.constant dense<0.000000e+00> : vector<16x128xf32>
    %14 = tpu.matmul %11, %13, %cst_9 {dimension_numbers = #tpu.dot_dimension_numbers<[1], [0], [0], [1], [0, 0, 1, 1], [], []>, precision = #tpu.contract_precision<fp32>} : vector<16x128xf32>, vector<128x128xf32>, vector<16x128xf32> -> vector<16x128xf32>
    %c0_10 = arith.constant 0 : index
    %c256 = arith.constant 256 : index
    %15 = vector.load %arg3[%c0_10, %c256] : memref<1x512xf32, #tpu.memory_space<vmem>>, vector<1x128xf32>
    %16 = vector.broadcast %15 : vector<1x128xf32> to vector<16x128xf32>
    %17 = arith.addf %14, %16 : vector<16x128xf32>
    %cst_11 = arith.constant 0.000000e+00 : f32
    %18 = vector.broadcast %cst_11 : f32 to vector<16x128xf32>
    %19 = arith.cmpf oge, %17, %18 : vector<16x128xf32>
    %cst_12 = arith.constant 0.00999999977 : f32
    %20 = vector.broadcast %cst_12 : f32 to vector<16x128xf32>
    %21 = arith.mulf %20, %17 : vector<16x128xf32>
    %22 = arith.select %19, %17, %21 : vector<16x128xi1>, vector<16x128xf32>
    %c0_13 = arith.constant 0 : index
    %c0_14 = arith.constant 0 : index
    %23 = vector.load %arg5[%c0_13, %c0_14] : memref<128x128xf32, #tpu.memory_space<vmem>>, vector<128x128xf32>
    %cst_15 = arith.constant dense<0.000000e+00> : vector<16x128xf32>
    %24 = tpu.matmul %22, %23, %cst_15 {dimension_numbers = #tpu.dot_dimension_numbers<[1], [0], [0], [1], [0, 0, 1, 1], [], []>, precision = #tpu.contract_precision<fp32>} : vector<16x128xf32>, vector<128x128xf32>, vector<16x128xf32> -> vector<16x128xf32>
    %c0_16 = arith.constant 0 : index
    %c384 = arith.constant 384 : index
    %25 = vector.load %arg3[%c0_16, %c384] : memref<1x512xf32, #tpu.memory_space<vmem>>, vector<1x128xf32>
    %26 = vector.broadcast %25 : vector<1x128xf32> to vector<16x128xf32>
    %27 = arith.addf %24, %26 : vector<16x128xf32>
    %cst_17 = arith.constant 0.000000e+00 : f32
    %28 = vector.broadcast %cst_17 : f32 to vector<16x128xf32>
    %29 = arith.cmpf oge, %27, %28 : vector<16x128xf32>
    %cst_18 = arith.constant 0.00999999977 : f32
    %30 = vector.broadcast %cst_18 : f32 to vector<16x128xf32>
    %31 = arith.mulf %30, %27 : vector<16x128xf32>
    %32 = arith.select %29, %27, %31 : vector<16x128xi1>, vector<16x128xf32>
    %33 = arith.addf %32, %12 : vector<16x128xf32>
    %c0_19 = arith.constant 0 : index
    %c0_20 = arith.constant 0 : index
    %34 = vector.load %arg6[%c0_19, %c0_20] : memref<16x128xf32, #tpu.memory_space<vmem>>, vector<16x128xf32>
    tpu.vector_store %arg6[%c0_19, %c0_20], %33 {strides = array<i32>} : memref<16x128xf32, #tpu.memory_space<vmem>>, vector<16x128xf32>,
    return
  }
  func.func @transform_0(%arg0: i32) -> (i32, i32) {
    %c0_i32 = arith.constant 0 : i32
    %c0_i32_0 = arith.constant 0 : i32
    return %arg0, %c0_i32 : i32, i32
  }
  func.func @transform_1(%arg0: i32) -> (i32, i32) {
    %c0_i32 = arith.constant 0 : i32
    %c0_i32_0 = arith.constant 0 : i32
    %c0_i32_1 = arith.constant 0 : i32
    return %c0_i32, %c0_i32_0 : i32, i32
  }
  func.func @transform_2(%arg0: i32) -> (i32, i32) {
    %c0_i32 = arith.constant 0 : i32
    %c0_i32_0 = arith.constant 0 : i32
    %c0_i32_1 = arith.constant 0 : i32
    return %c0_i32, %c0_i32_0 : i32, i32
  }
  func.func @transform_3(%arg0: i32) -> (i32, i32) {
    %c0_i32 = arith.constant 0 : i32
    %c0_i32_0 = arith.constant 0 : i32
    %c0_i32_1 = arith.constant 0 : i32
    return %c0_i32, %c0_i32_0 : i32, i32
  }
  func.func @transform_4(%arg0: i32) -> (i32, i32) {
    %c0_i32 = arith.constant 0 : i32
    %c0_i32_0 = arith.constant 0 : i32
    %c0_i32_1 = arith.constant 0 : i32
    return %c0_i32, %c0_i32_0 : i32, i32
  }
  func.func @transform_5(%arg0: i32) -> (i32, i32) {
    %c0_i32 = arith.constant 0 : i32
    %c0_i32_0 = arith.constant 0 : i32
    return %arg0, %c0_i32 : i32, i32
  }
}

</mosaic_0001>

<llo_original>
// kernel: ff_forward.1
$region0: #{ff_forward.1}
  #allocation0 [shape = 'u32[]', space=smem, size = 0x4, offset = 0x4, fixed_abs, tag = 'smem constant byte address 0x4 - core index']
  #allocation1 [shape = 'u32[144,128]{1,0:T(1,128)}', space=vmem, size = 0x12000, scoped, tag = 'internal scratch']
  %s0 = inlined_call_operand.vmem [shape: f32[8,128], index: 0, kind: input, shape index: {}]
  %s1 = inlined_call_operand.vmem [shape: f32[128,256], index: 1, kind: input, shape index: {}]
  %s2 = inlined_call_operand.vmem [shape: f32[1,512], index: 2, kind: input, shape index: {}]
  %s3 = inlined_call_operand.vmem [shape: f32[128,128], index: 3, kind: input, shape index: {}]
  %s4 = inlined_call_operand.vmem [shape: f32[128,128], index: 4, kind: input, shape index: {}]
  %s5 = inlined_call_operand.hbm [shape: f32[8,128], index: 5, kind: output, shape index: {}]
  %s6 = sld [smem:[#allocation0]]
  $region30: #{ff_forward.1} parent=0
    _
  %s8 = ssub.s32 1, %s6
  %s9 = scalar_select 0, %s8, %s6
  $region1: #{ff_forward.1} parent=0
    #allocation2 [shape = 'u8[8192]{0}', space=vmem, size = 0x2000, scoped, tag = 'output window, operand 0, single buffered']
    #allocation3 [shape = 's32[1]{0}', space=sflag, size = 0x4, scoped, tag = 'scoped memory for ff_forward.1']
    %10 = vsyncpa [#allocation3], 0
    // Predicated region
    $region2: #{ff_forward.1} parent=1 // pred_check
      _
    $region3: #{ff_forward.1} parent=1 // pred_check_branch
      %12 = sbr.rel (0) target = $region5
    $region4: #{ff_forward.1} parent=1 // pred_region
      _
    $region5: #{ff_forward.1} parent=1 // pred_fallthru
      _
    // Predicated region
    $region6: #{ff_forward.1} parent=1 // pred_check
      _
    $region7: #{ff_forward.1} parent=1 // pred_check_branch
      %14 = sbr.rel (0) target = $region9
    $region8: #{ff_forward.1} parent=1 // pred_region
      _
    $region9: #{ff_forward.1} parent=1 // pred_fallthru
      _
    // Predicated region
    $region10: #{ff_forward.1} parent=1 // pred_check
      _
    $region11: #{ff_forward.1} parent=1 // pred_check_branch
      %16 = sbr.rel (0) target = $region13
    $region12: #{ff_forward.1} parent=1 // pred_region
      _
    $region13: #{ff_forward.1} parent=1 // pred_fallthru
      _
    // Predicated region
    $region14: #{ff_forward.1} parent=1 // pred_check
      _
    $region15: #{ff_forward.1} parent=1 // pred_check_branch
      %18 = sbr.rel (0) target = $region17
    $region16: #{ff_forward.1} parent=1 // pred_region
      _
    $region17: #{ff_forward.1} parent=1 // pred_fallthru
      _
    // Predicated region
    $region18: #{ff_forward.1} parent=1 // pred_check
      _
    $region19: #{ff_forward.1} parent=1 // pred_check_branch
      %20 = sbr.rel (0) target = $region21
    $region20: #{ff_forward.1} parent=1 // pred_region
      _
    $region21: #{ff_forward.1} parent=1 // pred_fallthru
      _
    %v21 = vld [vmem:[%s0] sm:$0xff]
    %v22 = vld [vmem:[%s0 + $0x8] sm:$0xff]
    %v23 = vld [vmem:[%s1] sm:$0xff]
    %v24 = vld [vmem:[%s1 + $0x8] sm:$0xff]
    %v25 = vld [vmem:[%s1 + $0x10] sm:$0xff]
    %v26 = vld [vmem:[%s1 + $0x18] sm:$0xff]
    %v27 = vld [vmem:[%s1 + $0x20] sm:$0xff]
    %v28 = vld [vmem:[%s1 + $0x28] sm:$0xff]
    %v29 = vld [vmem:[%s1 + $0x30] sm:$0xff]
    %v30 = vld [vmem:[%s1 + $0x38] sm:$0xff]
    %v31 = vld [vmem:[%s1 + $0x40] sm:$0xff]
    %v32 = vld [vmem:[%s1 + $0x48] sm:$0xff]
    %v33 = vld [vmem:[%s1 + $0x50] sm:$0xff]
    %v34 = vld [vmem:[%s1 + $0x58] sm:$0xff]
    %v35 = vld [vmem:[%s1 + $0x60] sm:$0xff]
    %v36 = vld [vmem:[%s1 + $0x68] sm:$0xff]
    %v37 = vld [vmem:[%s1 + $0x70] sm:$0xff]
    %v38 = vld [vmem:[%s1 + $0x78] sm:$0xff]
    %v39 = vld [vmem:[%s1 + $0x80] sm:$0xff]
    %v40 = vld [vmem:[%s1 + $0x88] sm:$0xff]
    %v41 = vld [vmem:[%s1 + $0x90] sm:$0xff]
    %v42 = vld [vmem:[%s1 + $0x98] sm:$0xff]
    %v43 = vld [vmem:[%s1 + $0xa0] sm:$0xff]
    %v44 = vld [vmem:[%s1 + $0xa8] sm:$0xff]
    %v45 = vld [vmem:[%s1 + $0xb0] sm:$0xff]
    %v46 = vld [vmem:[%s1 + $0xb8] sm:$0xff]
    %v47 = vld [vmem:[%s1 + $0xc0] sm:$0xff]
    %v48 = vld [vmem:[%s1 + $0xc8] sm:$0xff]
    %v49 = vld [vmem:[%s1 + $0xd0] sm:$0xff]
    %v50 = vld [vmem:[%s1 + $0xd8] sm:$0xff]
    %v51 = vld [vmem:[%s1 + $0xe0] sm:$0xff]
    %v52 = vld [vmem:[%s1 + $0xe8] sm:$0xff]
    %v53 = vld [vmem:[%s1 + $0xf0] sm:$0xff]
    %v54 = vld [vmem:[%s1 + $0xf8] sm:$0xff]
    %v55 = vld [vmem:[%s2] sm:$0x3]
    %v57 = vlaneseq
    %v58 = vshrl.u32 %v57, 7
    %v59 = vsub.s32 0, %v58
    %v60 = vrot.slane %v55, %v59
    %v61 = vlaneseq
    %v62 = vshrl.u32 %v61, 7
    %v63 = vsub.s32 1, %v62
    %v64 = vrot.slane %v55, %v63
    %v67 = vand.u32 %v24, 4294901760
    %68 = vmatprep.subr.mxu0 %v67
    %v69 = vand.u32 %v23, 4294901760
    %70 = vmatpush1.msra.mxu0 %v69
    %v71 = vand.u32 %v26, 4294901760
    %72 = vmatprep.subr.mxu0 %v71
    %v73 = vand.u32 %v25, 4294901760
    %74 = vmatpush1.msra.mxu0 %v73
    %v75 = vand.u32 %v28, 4294901760
    %76 = vmatprep.subr.mxu0 %v75
    %v77 = vand.u32 %v27, 4294901760
    %78 = vmatpush1.msra.mxu0 %v77
    %v79 = vand.u32 %v30, 4294901760
    %80 = vmatprep.subr.mxu0 %v79
    %v81 = vand.u32 %v29, 4294901760
    %82 = vmatpush1.msra.mxu0 %v81
    %v83 = vand.u32 %v32, 4294901760
    %84 = vmatprep.subr.mxu0 %v83
    %v85 = vand.u32 %v31, 4294901760
    %86 = vmatpush1.msra.mxu0 %v85
    %v87 = vand.u32 %v34, 4294901760
    %88 = vmatprep.subr.mxu0 %v87
    %v89 = vand.u32 %v33, 4294901760
    %90 = vmatpush1.msra.mxu0 %v89
    %v91 = vand.u32 %v36, 4294901760
    %92 = vmatprep.subr.mxu0 %v91
    %v93 = vand.u32 %v35, 4294901760
    %94 = vmatpush1.msra.mxu0 %v93
    %v95 = vand.u32 %v38, 4294901760
    %96 = vmatprep.subr.mxu0 %v95
    %v97 = vand.u32 %v37, 4294901760
    %98 = vmatpush1.msra.mxu0 %v97
    %v99 = vand.u32 %v40, 4294901760
    %100 = vmatprep.subr.mxu0 %v99
    %v101 = vand.u32 %v39, 4294901760
    %102 = vmatpush1.msra.mxu0 %v101
    %v103 = vand.u32 %v42, 4294901760
    %104 = vmatprep.subr.mxu0 %v103
    %v105 = vand.u32 %v41, 4294901760
    %106 = vmatpush1.msra.mxu0 %v105
    %v107 = vand.u32 %v44, 4294901760
    %108 = vmatprep.subr.mxu0 %v107
    %v109 = vand.u32 %v43, 4294901760
    %110 = vmatpush1.msra.mxu0 %v109
    %v111 = vand.u32 %v46, 4294901760
    %112 = vmatprep.subr.mxu0 %v111
    %v113 = vand.u32 %v45, 4294901760
    %114 = vmatpush1.msra.mxu0 %v113
    %v115 = vand.u32 %v48, 4294901760
    %116 = vmatprep.subr.mxu0 %v115
    %v117 = vand.u32 %v47, 4294901760
    %118 = vmatpush1.msra.mxu0 %v117
    %v119 = vand.u32 %v50, 4294901760
    %120 = vmatprep.subr.mxu0 %v119
    %v121 = vand.u32 %v49, 4294901760
    %122 = vmatpush1.msra.mxu0 %v121
    %v123 = vand.u32 %v52, 4294901760
    %124 = vmatprep.subr.mxu0 %v123
    %v125 = vand.u32 %v51, 4294901760
    %126 = vmatpush1.msra.mxu0 %v125
    %v127 = vand.u32 %v54, 4294901760
    %128 = vmatprep.subr.mxu0 %v127
    %v129 = vand.u32 %v53, 4294901760
    %130 = vmatpush1.msra.mxu0 %v129
    %131 = vmatprep.subr.mxu0 0.0
    %132 = vmatpush1.msra.mxu0 0.0
    %133 = vmatprep.subr.mxu0 0.0
    %134 = vmatpush1.msra.mxu0 0.0
    %135 = vmatprep.subr.mxu0 0.0
    %136 = vmatpush1.msra.mxu0 0.0
    %137 = vmatprep.subr.mxu0 0.0
    %138 = vmatpush1.msra.mxu0 0.0
    %139 = vmatprep.subr.mxu0 0.0
    %140 = vmatpush1.msra.mxu0 0.0
    %141 = vmatprep.subr.mxu0 0.0
    %142 = vmatpush1.msra.mxu0 0.0
    %143 = vmatprep.subr.mxu0 0.0
    %144 = vmatpush1.msra.mxu0 0.0
    %145 = vmatprep.subr.mxu0 0.0
    %146 = vmatpush1.msra.mxu0 0.0
    %147 = vmatprep.subr.mxu0 0.0
    %148 = vmatpush1.msra.mxu0 0.0
    %149 = vmatprep.subr.mxu0 0.0
    %150 = vmatpush1.msra.mxu0 0.0
    %151 = vmatprep.subr.mxu0 0.0
    %152 = vmatpush1.msra.mxu0 0.0
    %153 = vmatprep.subr.mxu0 0.0
    %154 = vmatpush1.msra.mxu0 0.0
    %155 = vmatprep.subr.mxu0 0.0
    %156 = vmatpush1.msra.mxu0 0.0
    %157 = vmatprep.subr.mxu0 0.0
    %158 = vmatpush1.msra.mxu0 0.0
    %159 = vmatprep.subr.mxu0 0.0
    %160 = vmatpush1.msra.mxu0 0.0
    %161 = vmatprep.subr.mxu0 0.0
    %162 = vmatpush1.msra.mxu0 0.0
    %163 = vmatprep.mubr.f32.mxu0 0.0
    %v164 = vand.u32 %v21, 4294901760
    %v165 = vsub.f32 %v21, %v164
    %v166 = vand.u32 %v165, 4294901760
    %v167 = vsub.f32 %v165, %v166
    %v168 = vand.u32 %v167, 4294901760
    %169 = vmatmul.mubr.f32.gmra.mrb[0].mxu0 %v168
    %v170 = vpop.f32.mrb[0].mxu0
    %v171 = vadd.f32 %v60, %v170
    %v172 = vpop.f32.mrb[0].mxu0
    %v173 = vadd.f32 %v64, %v172
    %174 = vmatprep.mubr.f32.mxu0 0.0
    %v175 = vand.u32 %v22, 4294901760
    %v176 = vsub.f32 %v22, %v175
    %v177 = vand.u32 %v176, 4294901760
    %v178 = vsub.f32 %v176, %v177
    %v179 = vand.u32 %v178, 4294901760
    %180 = vmatmul.mubr.f32.gmra.mrb[0].mxu0 %v179
    %v181 = vpop.f32.mrb[0].mxu0
    %v182 = vadd.f32 %v60, %v181
    %v183 = vpop.f32.mrb[0].mxu0
    %v184 = vadd.f32 %v64, %v183
    %185 = vdwg.mxu0
    %v186 = vand.u32 %v24, 4294901760
    %v187 = vsub.f32 %v24, %v186
    %v188 = vand.u32 %v187, 4294901760
    %v189 = vsub.f32 %v187, %v188
    %v190 = vand.u32 %v189, 4294901760
    %191 = vmatprep.subr.mxu0 %v190
    %v192 = vand.u32 %v23, 4294901760
    %v193 = vsub.f32 %v23, %v192
    %v194 = vand.u32 %v193, 4294901760
    %v195 = vsub.f32 %v193, %v194
    %v196 = vand.u32 %v195, 4294901760
    %197 = vmatpush1.msra.mxu0 %v196
    %v198 = vand.u32 %v26, 4294901760
    %v199 = vsub.f32 %v26, %v198
    %v200 = vand.u32 %v199, 4294901760
    %v201 = vsub.f32 %v199, %v200
    %v202 = vand.u32 %v201, 4294901760
    %203 = vmatprep.subr.mxu0 %v202
    %v204 = vand.u32 %v25, 4294901760
    %v205 = vsub.f32 %v25, %v204
    %v206 = vand.u32 %v205, 4294901760
    %v207 = vsub.f32 %v205, %v206
    %v208 = vand.u32 %v207, 4294901760
    %209 = vmatpush1.msra.mxu0 %v208
    %v210 = vand.u32 %v28, 4294901760
    %v211 = vsub.f32 %v28, %v210
    %v212 = vand.u32 %v211, 4294901760
    %v213 = vsub.f32 %v211, %v212
    %v214 = vand.u32 %v213, 4294901760
    %215 = vmatprep.subr.mxu0 %v214
    %v216 = vand.u32 %v27, 4294901760
    %v217 = vsub.f32 %v27, %v216
    %v218 = vand.u32 %v217, 4294901760
    %v219 = vsub.f32 %v217, %v218
    %v220 = vand.u32 %v219, 4294901760
    %221 = vmatpush1.msra.mxu0 %v220
    %v222 = vand.u32 %v30, 4294901760
    %v223 = vsub.f32 %v30, %v222
    %v224 = vand.u32 %v223, 4294901760
    %v225 = vsub.f32 %v223, %v224
    %v226 = vand.u32 %v225, 4294901760
    %227 = vmatprep.subr.mxu0 %v226
    %v228 = vand.u32 %v29, 4294901760
    %v229 = vsub.f32 %v29, %v228
    %v230 = vand.u32 %v229, 4294901760
    %v231 = vsub.f32 %v229, %v230
    %v232 = vand.u32 %v231, 4294901760
    %233 = vmatpush1.msra.mxu0 %v232
    %v234 = vand.u32 %v32, 4294901760
    %v235 = vsub.f32 %v32, %v234
    %v236 = vand.u32 %v235, 4294901760
    %v237 = vsub.f32 %v235, %v236
    %v238 = vand.u32 %v237, 4294901760
    %239 = vmatprep.subr.mxu0 %v238
    %v240 = vand.u32 %v31, 4294901760
    %v241 = vsub.f32 %v31, %v240
    %v242 = vand.u32 %v241, 4294901760
    %v243 = vsub.f32 %v241, %v242
    %v244 = vand.u32 %v243, 4294901760
    %245 = vmatpush1.msra.mxu0 %v244
    %v246 = vand.u32 %v34, 4294901760
    %v247 = vsub.f32 %v34, %v246
    %v248 = vand.u32 %v247, 4294901760
    %v249 = vsub.f32 %v247, %v248
    %v250 = vand.u32 %v249, 4294901760
    %251 = vmatprep.subr.mxu0 %v250
    %v252 = vand.u32 %v33, 4294901760
    %v253 = vsub.f32 %v33, %v252
    %v254 = vand.u32 %v253, 4294901760
    %v255 = vsub.f32 %v253, %v254
    %v256 = vand.u32 %v255, 4294901760
    %257 = vmatpush1.msra.mxu0 %v256
    %v258 = vand.u32 %v36, 4294901760
    %v259 = vsub.f32 %v36, %v258
    %v260 = vand.u32 %v259, 4294901760
    %v261 = vsub.f32 %v259, %v260
    %v262 = vand.u32 %v261, 4294901760
    %263 = vmatprep.subr.mxu0 %v262
    %v264 = vand.u32 %v35, 4294901760
    %v265 = vsub.f32 %v35, %v264
    %v266 = vand.u32 %v265, 4294901760
    %v267 = vsub.f32 %v265, %v266
    %v268 = vand.u32 %v267, 4294901760
    %269 = vmatpush1.msra.mxu0 %v268
    %v270 = vand.u32 %v38, 4294901760
    %v271 = vsub.f32 %v38, %v270
    %v272 = vand.u32 %v271, 4294901760
    %v273 = vsub.f32 %v271, %v272
    %v274 = vand.u32 %v273, 4294901760
    %275 = vmatprep.subr.mxu0 %v274
    %v276 = vand.u32 %v37, 4294901760
    %v277 = vsub.f32 %v37, %v276
    %v278 = vand.u32 %v277, 4294901760
    %v279 = vsub.f32 %v277, %v278
    %v280 = vand.u32 %v279, 4294901760
    %281 = vmatpush1.msra.mxu0 %v280
    %v282 = vand.u32 %v40, 4294901760
    %v283 = vsub.f32 %v40, %v282
    %v284 = vand.u32 %v283, 4294901760
    %v285 = vsub.f32 %v283, %v284
    %v286 = vand.u32 %v285, 4294901760
    %287 = vmatprep.subr.mxu0 %v286
    %v288 = vand.u32 %v39, 4294901760
    %v289 = vsub.f32 %v39, %v288
    %v290 = vand.u32 %v289, 4294901760
    %v291 = vsub.f32 %v289, %v290
    %v292 = vand.u32 %v291, 4294901760
    %293 = vmatpush1.msra.mxu0 %v292
    %v294 = vand.u32 %v42, 4294901760
    %v295 = vsub.f32 %v42, %v294
    %v296 = vand.u32 %v295, 4294901760
    %v297 = vsub.f32 %v295, %v296
    %v298 = vand.u32 %v297, 4294901760
    %299 = vmatprep.subr.mxu0 %v298
    %v300 = vand.u32 %v41, 4294901760
    %v301 = vsub.f32 %v41, %v300
    %v302 = vand.u32 %v301, 4294901760
    %v303 = vsub.f32 %v301, %v302
    %v304 = vand.u32 %v303, 4294901760
    %305 = vmatpush1.msra.mxu0 %v304
    %v306 = vand.u32 %v44, 4294901760
    %v307 = vsub.f32 %v44, %v306
    %v308 = vand.u32 %v307, 4294901760
    %v309 = vsub.f32 %v307, %v308
    %v310 = vand.u32 %v309, 4294901760
    %311 = vmatprep.subr.mxu0 %v310
    %v312 = vand.u32 %v43, 4294901760
    %v313 = vsub.f32 %v43, %v312
    %v314 = vand.u32 %v313, 4294901760
    %v315 = vsub.f32 %v313, %v314
    %v316 = vand.u32 %v315, 4294901760
    %317 = vmatpush1.msra.mxu0 %v316
    %v318 = vand.u32 %v46, 4294901760
    %v319 = vsub.f32 %v46, %v318
    %v320 = vand.u32 %v319, 4294901760
    %v321 = vsub.f32 %v319, %v320
    %v322 = vand.u32 %v321, 4294901760
    %323 = vmatprep.subr.mxu0 %v322
    %v324 = vand.u32 %v45, 4294901760
    %v325 = vsub.f32 %v45, %v324
    %v326 = vand.u32 %v325, 4294901760
    %v327 = vsub.f32 %v325, %v326
    %v328 = vand.u32 %v327, 4294901760
    %329 = vmatpush1.msra.mxu0 %v328
    %v330 = vand.u32 %v48, 4294901760
    %v331 = vsub.f32 %v48, %v330
    %v332 = vand.u32 %v331, 4294901760
    %v333 = vsub.f32 %v331, %v332
    %v334 = vand.u32 %v333, 4294901760
    %335 = vmatprep.subr.mxu0 %v334
    %v336 = vand.u32 %v47, 4294901760
    %v337 = vsub.f32 %v47, %v336
    %v338 = vand.u32 %v337, 4294901760
    %v339 = vsub.f32 %v337, %v338
    %v340 = vand.u32 %v339, 4294901760
    %341 = vmatpush1.msra.mxu0 %v340
    %v342 = vand.u32 %v50, 4294901760
    %v343 = vsub.f32 %v50, %v342
    %v344 = vand.u32 %v343, 4294901760
    %v345 = vsub.f32 %v343, %v344
    %v346 = vand.u32 %v345, 4294901760
    %347 = vmatprep.subr.mxu0 %v346
    %v348 = vand.u32 %v49, 4294901760
    %v349 = vsub.f32 %v49, %v348
    %v350 = vand.u32 %v349, 4294901760
    %v351 = vsub.f32 %v349, %v350
    %v352 = vand.u32 %v351, 4294901760
    %353 = vmatpush1.msra.mxu0 %v352
    %v354 = vand.u32 %v52, 4294901760
    %v355 = vsub.f32 %v52, %v354
    %v356 = vand.u32 %v355, 4294901760
    %v357 = vsub.f32 %v355, %v356
    %v358 = vand.u32 %v357, 4294901760
    %359 = vmatprep.subr.mxu0 %v358
    %v360 = vand.u32 %v51, 4294901760
    %v361 = vsub.f32 %v51, %v360
    %v362 = vand.u32 %v361, 4294901760
    %v363 = vsub.f32 %v361, %v362
    %v364 = vand.u32 %v363, 4294901760
    %365 = vmatpush1.msra.mxu0 %v364
    %v366 = vand.u32 %v54, 4294901760
    %v367 = vsub.f32 %v54, %v366
    %v368 = vand.u32 %v367, 4294901760
    %v369 = vsub.f32 %v367, %v368
    %v370 = vand.u32 %v369, 4294901760
    %371 = vmatprep.subr.mxu0 %v370
    %v372 = vand.u32 %v53, 4294901760
    %v373 = vsub.f32 %v53, %v372
    %v374 = vand.u32 %v373, 4294901760
    %v375 = vsub.f32 %v373, %v374
    %v376 = vand.u32 %v375, 4294901760
    %377 = vmatpush1.msra.mxu0 %v376
    %378 = vmatprep.subr.mxu0 0.0
    %379 = vmatpush1.msra.mxu0 0.0
    %380 = vmatprep.subr.mxu0 0.0
    %381 = vmatpush1.msra.mxu0 0.0
    %382 = vmatprep.subr.mxu0 0.0
    %383 = vmatpush1.msra.mxu0 0.0
    %384 = vmatprep.subr.mxu0 0.0
    %385 = vmatpush1.msra.mxu0 0.0
    %386 = vmatprep.subr.mxu0 0.0
    %387 = vmatpush1.msra.mxu0 0.0
    %388 = vmatprep.subr.mxu0 0.0
    %389 = vmatpush1.msra.mxu0 0.0
    %390 = vmatprep.subr.mxu0 0.0
    %391 = vmatpush1.msra.mxu0 0.0
    %392 = vmatprep.subr.mxu0 0.0
    %393 = vmatpush1.msra.mxu0 0.0
    %394 = vmatprep.subr.mxu0 0.0
    %395 = vmatpush1.msra.mxu0 0.0
    %396 = vmatprep.subr.mxu0 0.0
    %397 = vmatpush1.msra.mxu0 0.0
    %398 = vmatprep.subr.mxu0 0.0
    %399 = vmatpush1.msra.mxu0 0.0
    %400 = vmatprep.subr.mxu0 0.0
    %401 = vmatpush1.msra.mxu0 0.0
    %402 = vmatprep.subr.mxu0 0.0
    %403 = vmatpush1.msra.mxu0 0.0
    %404 = vmatprep.subr.mxu0 0.0
    %405 = vmatpush1.msra.mxu0 0.0
    %406 = vmatprep.subr.mxu0 0.0
    %407 = vmatpush1.msra.mxu0 0.0
    %408 = vmatprep.subr.mxu0 0.0
    %409 = vmatpush1.msra.mxu0 0.0
    %410 = vmatprep.mubr.f32.mxu0 0.0
    %v411 = vand.u32 %v21, 4294901760
    %412 = vmatmul.mubr.f32.gmra.mrb[0].mxu0 %v411
    %v413 = vpop.f32.mrb[0].mxu0
    %v414 = vadd.f32 %v171, %v413
    %v415 = vpop.f32.mrb[0].mxu0
    %v416 = vadd.f32 %v173, %v415
    %417 = vmatprep.mubr.f32.mxu0 0.0
    %v418 = vand.u32 %v22, 4294901760
    %419 = vmatmul.mubr.f32.gmra.mrb[0].mxu0 %v418
    %v420 = vpop.f32.mrb[0].mxu0
    %v421 = vadd.f32 %v182, %v420
    %v422 = vpop.f32.mrb[0].mxu0
    %v423 = vadd.f32 %v184, %v422
    %424 = vdwg.mxu0
    %v425 = vand.u32 %v24, 4294901760
    %v426 = vsub.f32 %v24, %v425
    %427 = vmatprep.subr.mxu0 %v426
    %v428 = vand.u32 %v23, 4294901760
    %v429 = vsub.f32 %v23, %v428
    %430 = vmatpush1.msra.mxu0 %v429
    %v431 = vand.u32 %v26, 4294901760
    %v432 = vsub.f32 %v26, %v431
    %433 = vmatprep.subr.mxu0 %v432
    %v434 = vand.u32 %v25, 4294901760
    %v435 = vsub.f32 %v25, %v434
    %436 = vmatpush1.msra.mxu0 %v435
    %v437 = vand.u32 %v28, 4294901760
    %v438 = vsub.f32 %v28, %v437
    %439 = vmatprep.subr.mxu0 %v438
    %v440 = vand.u32 %v27, 4294901760
    %v441 = vsub.f32 %v27, %v440
    %442 = vmatpush1.msra.mxu0 %v441
    %v443 = vand.u32 %v30, 4294901760
    %v444 = vsub.f32 %v30, %v443
    %445 = vmatprep.subr.mxu0 %v444
    %v446 = vand.u32 %v29, 4294901760
    %v447 = vsub.f32 %v29, %v446
    %448 = vmatpush1.msra.mxu0 %v447
    %v449 = vand.u32 %v32, 4294901760
    %v450 = vsub.f32 %v32, %v449
    %451 = vmatprep.subr.mxu0 %v450
    %v452 = vand.u32 %v31, 4294901760
    %v453 = vsub.f32 %v31, %v452
    %454 = vmatpush1.msra.mxu0 %v453
    %v455 = vand.u32 %v34, 4294901760
    %v456 = vsub.f32 %v34, %v455
    %457 = vmatprep.subr.mxu0 %v456
    %v458 = vand.u32 %v33, 4294901760
    %v459 = vsub.f32 %v33, %v458
    %460 = vmatpush1.msra.mxu0 %v459
    %v461 = vand.u32 %v36, 4294901760
    %v462 = vsub.f32 %v36, %v461
    %463 = vmatprep.subr.mxu0 %v462
    %v464 = vand.u32 %v35, 4294901760
    %v465 = vsub.f32 %v35, %v464
    %466 = vmatpush1.msra.mxu0 %v465
    %v467 = vand.u32 %v38, 4294901760
    %v468 = vsub.f32 %v38, %v467
    %469 = vmatprep.subr.mxu0 %v468
    %v470 = vand.u32 %v37, 4294901760
    %v471 = vsub.f32 %v37, %v470
    %472 = vmatpush1.msra.mxu0 %v471
    %v473 = vand.u32 %v40, 4294901760
    %v474 = vsub.f32 %v40, %v473
    %475 = vmatprep.subr.mxu0 %v474
    %v476 = vand.u32 %v39, 4294901760
    %v477 = vsub.f32 %v39, %v476
    %478 = vmatpush1.msra.mxu0 %v477
    %v479 = vand.u32 %v42, 4294901760
    %v480 = vsub.f32 %v42, %v479
    %481 = vmatprep.subr.mxu0 %v480
    %v482 = vand.u32 %v41, 4294901760
    %v483 = vsub.f32 %v41, %v482
    %484 = vmatpush1.msra.mxu0 %v483
    %v485 = vand.u32 %v44, 4294901760
    %v486 = vsub.f32 %v44, %v485
    %487 = vmatprep.subr.mxu0 %v486
    %v488 = vand.u32 %v43, 4294901760
    %v489 = vsub.f32 %v43, %v488
    %490 = vmatpush1.msra.mxu0 %v489
    %v491 = vand.u32 %v46, 4294901760
    %v492 = vsub.f32 %v46, %v491
    %493 = vmatprep.subr.mxu0 %v492
    %v494 = vand.u32 %v45, 4294901760
    %v495 = vsub.f32 %v45, %v494
    %496 = vmatpush1.msra.mxu0 %v495
    %v497 = vand.u32 %v48, 4294901760
    %v498 = vsub.f32 %v48, %v497
    %499 = vmatprep.subr.mxu0 %v498
    %v500 = vand.u32 %v47, 4294901760
    %v501 = vsub.f32 %v47, %v500
    %502 = vmatpush1.msra.mxu0 %v501
    %v503 = vand.u32 %v50, 4294901760
    %v504 = vsub.f32 %v50, %v503
    %505 = vmatprep.subr.mxu0 %v504
    %v506 = vand.u32 %v49, 4294901760
    %v507 = vsub.f32 %v49, %v506
    %508 = vmatpush1.msra.mxu0 %v507
    %v509 = vand.u32 %v52, 4294901760
    %v510 = vsub.f32 %v52, %v509
    %511 = vmatprep.subr.mxu0 %v510
    %v512 = vand.u32 %v51, 4294901760
    %v513 = vsub.f32 %v51, %v512
    %514 = vmatpush1.msra.mxu0 %v513
    %v515 = vand.u32 %v54, 4294901760
    %v516 = vsub.f32 %v54, %v515
    %517 = vmatprep.subr.mxu0 %v516
    %v518 = vand.u32 %v53, 4294901760
    %v519 = vsub.f32 %v53, %v518
    %520 = vmatpush1.msra.mxu0 %v519
    %521 = vmatprep.subr.mxu0 0.0
    %522 = vmatpush1.msra.mxu0 0.0
    %523 = vmatprep.subr.mxu0 0.0
    %524 = vmatpush1.msra.mxu0 0.0
    %525 = vmatprep.subr.mxu0 0.0
    %526 = vmatpush1.msra.mxu0 0.0
    %527 = vmatprep.subr.mxu0 0.0
    %528 = vmatpush1.msra.mxu0 0.0
    %529 = vmatprep.subr.mxu0 0.0
    %530 = vmatpush1.msra.mxu0 0.0
    %531 = vmatprep.subr.mxu0 0.0
    %532 = vmatpush1.msra.mxu0 0.0
    %533 = vmatprep.subr.mxu0 0.0
    %534 = vmatpush1.msra.mxu0 0.0
    %535 = vmatprep.subr.mxu0 0.0
    %536 = vmatpush1.msra.mxu0 0.0
    %537 = vmatprep.subr.mxu0 0.0
    %538 = vmatpush1.msra.mxu0 0.0
    %539 = vmatprep.subr.mxu0 0.0
    %540 = vmatpush1.msra.mxu0 0.0
    %541 = vmatprep.subr.mxu0 0.0
    %542 = vmatpush1.msra.mxu0 0.0
    %543 = vmatprep.subr.mxu0 0.0
    %544 = vmatpush1.msra.mxu0 0.0
    %545 = vmatprep.subr.mxu0 0.0
    %546 = vmatpush1.msra.mxu0 0.0
    %547 = vmatprep.subr.mxu0 0.0
    %548 = vmatpush1.msra.mxu0 0.0
    %549 = vmatprep.subr.mxu0 0.0
    %550 = vmatpush1.msra.mxu0 0.0
    %551 = vmatprep.subr.mxu0 0.0
    %552 = vmatpush1.msra.mxu0 0.0
    %553 = vmatprep.mubr.f32.mxu0 0.0
    %v554 = vand.u32 %v21, 4294901760
    %v555 = vsub.f32 %v21, %v554
    %556 = vmatmul.mubr.f32.gmra.mrb[0].mxu0 %v555
    %v557 = vpop.f32.mrb[0].mxu0
    %v558 = vadd.f32 %v414, %v557
    %v559 = vpop.f32.mrb[0].mxu0
    %v560 = vadd.f32 %v416, %v559
    %561 = vmatprep.mubr.f32.mxu0 0.0
    %v562 = vand.u32 %v22, 4294901760
    %v563 = vsub.f32 %v22, %v562
    %564 = vmatmul.mubr.f32.gmra.mrb[0].mxu0 %v563
    %v565 = vpop.f32.mrb[0].mxu0
    %v566 = vadd.f32 %v421, %v565
    %v567 = vpop.f32.mrb[0].mxu0
    %v568 = vadd.f32 %v423, %v567
    %569 = vdwg.mxu0
    %v570 = vand.u32 %v24, 4294901760
    %571 = vmatprep.subr.mxu0 %v570
    %v572 = vand.u32 %v23, 4294901760
    %573 = vmatpush1.msra.mxu0 %v572
    %v574 = vand.u32 %v26, 4294901760
    %575 = vmatprep.subr.mxu0 %v574
    %v576 = vand.u32 %v25, 4294901760
    %577 = vmatpush1.msra.mxu0 %v576
    %v578 = vand.u32 %v28, 4294901760
    %579 = vmatprep.subr.mxu0 %v578
    %v580 = vand.u32 %v27, 4294901760
    %581 = vmatpush1.msra.mxu0 %v580
    %v582 = vand.u32 %v30, 4294901760
    %583 = vmatprep.subr.mxu0 %v582
    %v584 = vand.u32 %v29, 4294901760
    %585 = vmatpush1.msra.mxu0 %v584
    %v586 = vand.u32 %v32, 4294901760
    %587 = vmatprep.subr.mxu0 %v586
    %v588 = vand.u32 %v31, 4294901760
    %589 = vmatpush1.msra.mxu0 %v588
    %v590 = vand.u32 %v34, 4294901760
    %591 = vmatprep.subr.mxu0 %v590
    %v592 = vand.u32 %v33, 4294901760
    %593 = vmatpush1.msra.mxu0 %v592
    %v594 = vand.u32 %v36, 4294901760
    %595 = vmatprep.subr.mxu0 %v594
    %v596 = vand.u32 %v35, 4294901760
    %597 = vmatpush1.msra.mxu0 %v596
    %v598 = vand.u32 %v38, 4294901760
    %599 = vmatprep.subr.mxu0 %v598
    %v600 = vand.u32 %v37, 4294901760
    %601 = vmatpush1.msra.mxu0 %v600
    %v602 = vand.u32 %v40, 4294901760
    %603 = vmatprep.subr.mxu0 %v602
    %v604 = vand.u32 %v39, 4294901760
    %605 = vmatpush1.msra.mxu0 %v604
    %v606 = vand.u32 %v42, 4294901760
    %607 = vmatprep.subr.mxu0 %v606
    %v608 = vand.u32 %v41, 4294901760
    %609 = vmatpush1.msra.mxu0 %v608
    %v610 = vand.u32 %v44, 4294901760
    %611 = vmatprep.subr.mxu0 %v610
    %v612 = vand.u32 %v43, 4294901760
    %613 = vmatpush1.msra.mxu0 %v612
    %v614 = vand.u32 %v46, 4294901760
    %615 = vmatprep.subr.mxu0 %v614
    %v616 = vand.u32 %v45, 4294901760
    %617 = vmatpush1.msra.mxu0 %v616
    %v618 = vand.u32 %v48, 4294901760
    %619 = vmatprep.subr.mxu0 %v618
    %v620 = vand.u32 %v47, 4294901760
    %621 = vmatpush1.msra.mxu0 %v620
    %v622 = vand.u32 %v50, 4294901760
    %623 = vmatprep.subr.mxu0 %v622
    %v624 = vand.u32 %v49, 4294901760
    %625 = vmatpush1.msra.mxu0 %v624
    %v626 = vand.u32 %v52, 4294901760
    %627 = vmatprep.subr.mxu0 %v626
    %v628 = vand.u32 %v51, 4294901760
    %629 = vmatpush1.msra.mxu0 %v628
    %v630 = vand.u32 %v54, 4294901760
    %631 = vmatprep.subr.mxu0 %v630
    %v632 = vand.u32 %v53, 4294901760
    %633 = vmatpush1.msra.mxu0 %v632
    %634 = vmatprep.subr.mxu0 0.0
    %635 = vmatpush1.msra.mxu0 0.0
    %636 = vmatprep.subr.mxu0 0.0
    %637 = vmatpush1.msra.mxu0 0.0
    %638 = vmatprep.subr.mxu0 0.0
    %639 = vmatpush1.msra.mxu0 0.0
    %640 = vmatprep.subr.mxu0 0.0
    %641 = vmatpush1.msra.mxu0 0.0
    %642 = vmatprep.subr.mxu0 0.0
    %643 = vmatpush1.msra.mxu0 0.0
    %644 = vmatprep.subr.mxu0 0.0
    %645 = vmatpush1.msra.mxu0 0.0
    %646 = vmatprep.subr.mxu0 0.0
    %647 = vmatpush1.msra.mxu0 0.0
    %648 = vmatprep.subr.mxu0 0.0
    %649 = vmatpush1.msra.mxu0 0.0
    %650 = vmatprep.subr.mxu0 0.0
    %651 = vmatpush1.msra.mxu0 0.0
    %652 = vmatprep.subr.mxu0 0.0
    %653 = vmatpush1.msra.mxu0 0.0
    %654 = vmatprep.subr.mxu0 0.0
    %655 = vmatpush1.msra.mxu0 0.0
    %656 = vmatprep.subr.mxu0 0.0
    %657 = vmatpush1.msra.mxu0 0.0
    %658 = vmatprep.subr.mxu0 0.0
    %659 = vmatpush1.msra.mxu0 0.0
    %660 = vmatprep.subr.mxu0 0.0
    %661 = vmatpush1.msra.mxu0 0.0
    %662 = vmatprep.subr.mxu0 0.0
    %663 = vmatpush1.msra.mxu0 0.0
    %664 = vmatprep.subr.mxu0 0.0
    %665 = vmatpush1.msra.mxu0 0.0
    %666 = vmatprep.mubr.f32.mxu0 0.0
    %v667 = vand.u32 %v21, 4294901760
    %v668 = vsub.f32 %v21, %v667
    %v669 = vand.u32 %v668, 4294901760
    %670 = vmatmul.mubr.f32.gmra.mrb[0].mxu0 %v669
    %v671 = vpop.f32.mrb[0].mxu0
    %v672 = vadd.f32 %v558, %v671
    %v673 = vpop.f32.mrb[0].mxu0
    %v674 = vadd.f32 %v560, %v673
    %675 = vmatprep.mubr.f32.mxu0 0.0
    %v676 = vand.u32 %v22, 4294901760
    %v677 = vsub.f32 %v22, %v676
    %v678 = vand.u32 %v677, 4294901760
    %679 = vmatmul.mubr.f32.gmra.mrb[0].mxu0 %v678
    %v680 = vpop.f32.mrb[0].mxu0
    %v681 = vadd.f32 %v566, %v680
    %v682 = vpop.f32.mrb[0].mxu0
    %v683 = vadd.f32 %v568, %v682
    %684 = vdwg.mxu0
    %v685 = vand.u32 %v24, 4294901760
    %v686 = vsub.f32 %v24, %v685
    %v687 = vand.u32 %v686, 4294901760
    %688 = vmatprep.subr.mxu0 %v687
    %v689 = vand.u32 %v23, 4294901760
    %v690 = vsub.f32 %v23, %v689
    %v691 = vand.u32 %v690, 4294901760
    %692 = vmatpush1.msra.mxu0 %v691
    %v693 = vand.u32 %v26, 4294901760
    %v694 = vsub.f32 %v26, %v693
    %v695 = vand.u32 %v694, 4294901760
    %696 = vmatprep.subr.mxu0 %v695
    %v697 = vand.u32 %v25, 4294901760
    %v698 = vsub.f32 %v25, %v697
    %v699 = vand.u32 %v698, 4294901760
    %700 = vmatpush1.msra.mxu0 %v699
    %v701 = vand.u32 %v28, 4294901760
    %v702 = vsub.f32 %v28, %v701
    %v703 = vand.u32 %v702, 4294901760
    %704 = vmatprep.subr.mxu0 %v703
    %v705 = vand.u32 %v27, 4294901760
    %v706 = vsub.f32 %v27, %v705
    %v707 = vand.u32 %v706, 4294901760
    %708 = vmatpush1.msra.mxu0 %v707
    %v709 = vand.u32 %v30, 4294901760
    %v710 = vsub.f32 %v30, %v709
    %v711 = vand.u32 %v710, 4294901760
    %712 = vmatprep.subr.mxu0 %v711
    %v713 = vand.u32 %v29, 4294901760
    %v714 = vsub.f32 %v29, %v713
    %v715 = vand.u32 %v714, 4294901760
    %716 = vmatpush1.msra.mxu0 %v715
    %v717 = vand.u32 %v32, 4294901760
    %v718 = vsub.f32 %v32, %v717
    %v719 = vand.u32 %v718, 4294901760
    %720 = vmatprep.subr.mxu0 %v719
    %v721 = vand.u32 %v31, 4294901760
    %v722 = vsub.f32 %v31, %v721
    %v723 = vand.u32 %v722, 4294901760
    %724 = vmatpush1.msra.mxu0 %v723
    %v725 = vand.u32 %v34, 4294901760
    %v726 = vsub.f32 %v34, %v725
    %v727 = vand.u32 %v726, 4294901760
    %728 = vmatprep.subr.mxu0 %v727
    %v729 = vand.u32 %v33, 4294901760
    %v730 = vsub.f32 %v33, %v729
    %v731 = vand.u32 %v730, 4294901760
    %732 = vmatpush1.msra.mxu0 %v731
    %v733 = vand.u32 %v36, 4294901760
    %v734 = vsub.f32 %v36, %v733
    %v735 = vand.u32 %v734, 4294901760
    %736 = vmatprep.subr.mxu0 %v735
    %v737 = vand.u32 %v35, 4294901760
    %v738 = vsub.f32 %v35, %v737
    %v739 = vand.u32 %v738, 4294901760
    %740 = vmatpush1.msra.mxu0 %v739
    %v741 = vand.u32 %v38, 4294901760
    %v742 = vsub.f32 %v38, %v741
    %v743 = vand.u32 %v742, 4294901760
    %744 = vmatprep.subr.mxu0 %v743
    %v745 = vand.u32 %v37, 4294901760
    %v746 = vsub.f32 %v37, %v745
    %v747 = vand.u32 %v746, 4294901760
    %748 = vmatpush1.msra.mxu0 %v747
    %v749 = vand.u32 %v40, 4294901760
    %v750 = vsub.f32 %v40, %v749
    %v751 = vand.u32 %v750, 4294901760
    %752 = vmatprep.subr.mxu0 %v751
    %v753 = vand.u32 %v39, 4294901760
    %v754 = vsub.f32 %v39, %v753
    %v755 = vand.u32 %v754, 4294901760
    %756 = vmatpush1.msra.mxu0 %v755
    %v757 = vand.u32 %v42, 4294901760
    %v758 = vsub.f32 %v42, %v757
    %v759 = vand.u32 %v758, 4294901760
    %760 = vmatprep.subr.mxu0 %v759
    %v761 = vand.u32 %v41, 4294901760
    %v762 = vsub.f32 %v41, %v761
    %v763 = vand.u32 %v762, 4294901760
    %764 = vmatpush1.msra.mxu0 %v763
    %v765 = vand.u32 %v44, 4294901760
    %v766 = vsub.f32 %v44, %v765
    %v767 = vand.u32 %v766, 4294901760
    %768 = vmatprep.subr.mxu0 %v767
    %v769 = vand.u32 %v43, 4294901760
    %v770 = vsub.f32 %v43, %v769
    %v771 = vand.u32 %v770, 4294901760
    %772 = vmatpush1.msra.mxu0 %v771
    %v773 = vand.u32 %v46, 4294901760
    %v774 = vsub.f32 %v46, %v773
    %v775 = vand.u32 %v774, 4294901760
    %776 = vmatprep.subr.mxu0 %v775
    %v777 = vand.u32 %v45, 4294901760
    %v778 = vsub.f32 %v45, %v777
    %v779 = vand.u32 %v778, 4294901760
    %780 = vmatpush1.msra.mxu0 %v779
    %v781 = vand.u32 %v48, 4294901760
    %v782 = vsub.f32 %v48, %v781
    %v783 = vand.u32 %v782, 4294901760
    %784 = vmatprep.subr.mxu0 %v783
    %v785 = vand.u32 %v47, 4294901760
    %v786 = vsub.f32 %v47, %v785
    %v787 = vand.u32 %v786, 4294901760
    %788 = vmatpush1.msra.mxu0 %v787
    %v789 = vand.u32 %v50, 4294901760
    %v790 = vsub.f32 %v50, %v789
    %v791 = vand.u32 %v790, 4294901760
    %792 = vmatprep.subr.mxu0 %v791
    %v793 = vand.u32 %v49, 4294901760
    %v794 = vsub.f32 %v49, %v793
    %v795 = vand.u32 %v794, 4294901760
    %796 = vmatpush1.msra.mxu0 %v795
    %v797 = vand.u32 %v52, 4294901760
    %v798 = vsub.f32 %v52, %v797
    %v799 = vand.u32 %v798, 4294901760
    %800 = vmatprep.subr.mxu0 %v799
    %v801 = vand.u32 %v51, 4294901760
    %v802 = vsub.f32 %v51, %v801
    %v803 = vand.u32 %v802, 4294901760
    %804 = vmatpush1.msra.mxu0 %v803
    %v805 = vand.u32 %v54, 4294901760
    %v806 = vsub.f32 %v54, %v805
    %v807 = vand.u32 %v806, 4294901760
    %808 = vmatprep.subr.mxu0 %v807
    %v809 = vand.u32 %v53, 4294901760
    %v810 = vsub.f32 %v53, %v809
    %v811 = vand.u32 %v810, 4294901760
    %812 = vmatpush1.msra.mxu0 %v811
    %813 = vmatprep.subr.mxu0 0.0
    %814 = vmatpush1.msra.mxu0 0.0
    %815 = vmatprep.subr.mxu0 0.0
    %816 = vmatpush1.msra.mxu0 0.0
    %817 = vmatprep.subr.mxu0 0.0
    %818 = vmatpush1.msra.mxu0 0.0
    %819 = vmatprep.subr.mxu0 0.0
    %820 = vmatpush1.msra.mxu0 0.0
    %821 = vmatprep.subr.mxu0 0.0
    %822 = vmatpush1.msra.mxu0 0.0
    %823 = vmatprep.subr.mxu0 0.0
    %824 = vmatpush1.msra.mxu0 0.0
    %825 = vmatprep.subr.mxu0 0.0
    %826 = vmatpush1.msra.mxu0 0.0
    %827 = vmatprep.subr.mxu0 0.0
    %828 = vmatpush1.msra.mxu0 0.0
    %829 = vmatprep.subr.mxu0 0.0
    %830 = vmatpush1.msra.mxu0 0.0
    %831 = vmatprep.subr.mxu0 0.0
    %832 = vmatpush1.msra.mxu0 0.0
    %833 = vmatprep.subr.mxu0 0.0
    %834 = vmatpush1.msra.mxu0 0.0
    %835 = vmatprep.subr.mxu0 0.0
    %836 = vmatpush1.msra.mxu0 0.0
    %837 = vmatprep.subr.mxu0 0.0
    %838 = vmatpush1.msra.mxu0 0.0
    %839 = vmatprep.subr.mxu0 0.0
    %840 = vmatpush1.msra.mxu0 0.0
    %841 = vmatprep.subr.mxu0 0.0
    %842 = vmatpush1.msra.mxu0 0.0
    %843 = vmatprep.subr.mxu0 0.0
    %844 = vmatpush1.msra.mxu0 0.0
    %845 = vmatprep.mubr.f32.mxu0 0.0
    %v846 = vand.u32 %v21, 4294901760
    %847 = vmatmul.mubr.f32.gmra.mrb[0].mxu0 %v846
    %v848 = vpop.f32.mrb[0].mxu0
    %v849 = vadd.f32 %v672, %v848
    %v850 = vpop.f32.mrb[0].mxu0
    %v851 = vadd.f32 %v674, %v850
    %852 = vmatprep.mubr.f32.mxu0 0.0
    %v853 = vand.u32 %v22, 4294901760
    %854 = vmatmul.mubr.f32.gmra.mrb[0].mxu0 %v853
    %v855 = vpop.f32.mrb[0].mxu0
    %v856 = vadd.f32 %v681, %v855
    %v857 = vpop.f32.mrb[0].mxu0
    %v858 = vadd.f32 %v683, %v857
    %859 = vdwg.mxu0
    %v860 = vand.u32 %v24, 4294901760
    %861 = vmatprep.subr.mxu0 %v860
    %v862 = vand.u32 %v23, 4294901760
    %863 = vmatpush1.msra.mxu0 %v862
    %v864 = vand.u32 %v26, 4294901760
    %865 = vmatprep.subr.mxu0 %v864
    %v866 = vand.u32 %v25, 4294901760
    %867 = vmatpush1.msra.mxu0 %v866
    %v868 = vand.u32 %v28, 4294901760
    %869 = vmatprep.subr.mxu0 %v868
    %v870 = vand.u32 %v27, 4294901760
    %871 = vmatpush1.msra.mxu0 %v870
    %v872 = vand.u32 %v30, 4294901760
    %873 = vmatprep.subr.mxu0 %v872
    %v874 = vand.u32 %v29, 4294901760
    %875 = vmatpush1.msra.mxu0 %v874
    %v876 = vand.u32 %v32, 4294901760
    %877 = vmatprep.subr.mxu0 %v876
    %v878 = vand.u32 %v31, 4294901760
    %879 = vmatpush1.msra.mxu0 %v878
    %v880 = vand.u32 %v34, 4294901760
    %881 = vmatprep.subr.mxu0 %v880
    %v882 = vand.u32 %v33, 4294901760
    %883 = vmatpush1.msra.mxu0 %v882
    %v884 = vand.u32 %v36, 4294901760
    %885 = vmatprep.subr.mxu0 %v884
    %v886 = vand.u32 %v35, 4294901760
    %887 = vmatpush1.msra.mxu0 %v886
    %v888 = vand.u32 %v38, 4294901760
    %889 = vmatprep.subr.mxu0 %v888
    %v890 = vand.u32 %v37, 4294901760
    %891 = vmatpush1.msra.mxu0 %v890
    %v892 = vand.u32 %v40, 4294901760
    %893 = vmatprep.subr.mxu0 %v892
    %v894 = vand.u32 %v39, 4294901760
    %895 = vmatpush1.msra.mxu0 %v894
    %v896 = vand.u32 %v42, 4294901760
    %897 = vmatprep.subr.mxu0 %v896
    %v898 = vand.u32 %v41, 4294901760
    %899 = vmatpush1.msra.mxu0 %v898
    %v900 = vand.u32 %v44, 4294901760
    %901 = vmatprep.subr.mxu0 %v900
    %v902 = vand.u32 %v43, 4294901760
    %903 = vmatpush1.msra.mxu0 %v902
    %v904 = vand.u32 %v46, 4294901760
    %905 = vmatprep.subr.mxu0 %v904
    %v906 = vand.u32 %v45, 4294901760
    %907 = vmatpush1.msra.mxu0 %v906
    %v908 = vand.u32 %v48, 4294901760
    %909 = vmatprep.subr.mxu0 %v908
    %v910 = vand.u32 %v47, 4294901760
    %911 = vmatpush1.msra.mxu0 %v910
    %v912 = vand.u32 %v50, 4294901760
    %913 = vmatprep.subr.mxu0 %v912
    %v914 = vand.u32 %v49, 4294901760
    %915 = vmatpush1.msra.mxu0 %v914
    %v916 = vand.u32 %v52, 4294901760
    %917 = vmatprep.subr.mxu0 %v916
    %v918 = vand.u32 %v51, 4294901760
    %919 = vmatpush1.msra.mxu0 %v918
    %v920 = vand.u32 %v54, 4294901760
    %921 = vmatprep.subr.mxu0 %v920
    %v922 = vand.u32 %v53, 4294901760
    %923 = vmatpush1.msra.mxu0 %v922
    %924 = vmatprep.subr.mxu0 0.0
    %925 = vmatpush1.msra.mxu0 0.0
    %926 = vmatprep.subr.mxu0 0.0
    %927 = vmatpush1.msra.mxu0 0.0
    %928 = vmatprep.subr.mxu0 0.0
    %929 = vmatpush1.msra.mxu0 0.0
    %930 = vmatprep.subr.mxu0 0.0
    %931 = vmatpush1.msra.mxu0 0.0
    %932 = vmatprep.subr.mxu0 0.0
    %933 = vmatpush1.msra.mxu0 0.0
    %934 = vmatprep.subr.mxu0 0.0
    %935 = vmatpush1.msra.mxu0 0.0
    %936 = vmatprep.subr.mxu0 0.0
    %937 = vmatpush1.msra.mxu0 0.0
    %938 = vmatprep.subr.mxu0 0.0
    %939 = vmatpush1.msra.mxu0 0.0
    %940 = vmatprep.subr.mxu0 0.0
    %941 = vmatpush1.msra.mxu0 0.0
    %942 = vmatprep.subr.mxu0 0.0
    %943 = vmatpush1.msra.mxu0 0.0
    %944 = vmatprep.subr.mxu0 0.0
    %945 = vmatpush1.msra.mxu0 0.0
    %946 = vmatprep.subr.mxu0 0.0
    %947 = vmatpush1.msra.mxu0 0.0
    %948 = vmatprep.subr.mxu0 0.0
    %949 = vmatpush1.msra.mxu0 0.0
    %950 = vmatprep.subr.mxu0 0.0
    %951 = vmatpush1.msra.mxu0 0.0
    %952 = vmatprep.subr.mxu0 0.0
    %953 = vmatpush1.msra.mxu0 0.0
    %954 = vmatprep.subr.mxu0 0.0
    %955 = vmatpush1.msra.mxu0 0.0
    %956 = vmatprep.mubr.f32.mxu0 0.0
    %v957 = vand.u32 %v21, 4294901760
    %958 = vmatmul.mubr.f32.gmra.mrb[0].mxu0 %v957
    %v959 = vpop.f32.mrb[0].mxu0
    %v960 = vadd.f32 %v849, %v959
    %v961 = vpop.f32.mrb[0].mxu0
    %v962 = vadd.f32 %v851, %v961
    %963 = vmatprep.mubr.f32.mxu0 0.0
    %v964 = vand.u32 %v22, 4294901760
    %965 = vmatmul.mubr.f32.gmra.mrb[0].mxu0 %v964
    %v966 = vpop.f32.mrb[0].mxu0
    %v967 = vadd.f32 %v856, %v966
    %v968 = vpop.f32.mrb[0].mxu0
    %v969 = vadd.f32 %v858, %v968
    %970 = vdwg.mxu0
    %vm971 = vcmp.ge.f32.partialorder %v960, 0.0
    %vm972 = vcmp.ge.f32.partialorder %v967, 0.0
    %v973 = vmul.f32 %v960, 0.01
    %v974 = vmul.f32 %v967, 0.01
    %v975 = vsel %vm971, %v960, %v973
    %v976 = vsel %vm972, %v967, %v974
    %v977 = vld [vmem:[%s3] sm:$0xff]
    %v978 = vld [vmem:[%s3 + $0x8] sm:$0xff]
    %v979 = vld [vmem:[%s3 + $0x10] sm:$0xff]
    %v980 = vld [vmem:[%s3 + $0x18] sm:$0xff]
    %v981 = vld [vmem:[%s3 + $0x20] sm:$0xff]
    %v982 = vld [vmem:[%s3 + $0x28] sm:$0xff]
    %v983 = vld [vmem:[%s3 + $0x30] sm:$0xff]
    %v984 = vld [vmem:[%s3 + $0x38] sm:$0xff]
    %v985 = vld [vmem:[%s3 + $0x40] sm:$0xff]
    %v986 = vld [vmem:[%s3 + $0x48] sm:$0xff]
    %v987 = vld [vmem:[%s3 + $0x50] sm:$0xff]
    %v988 = vld [vmem:[%s3 + $0x58] sm:$0xff]
    %v989 = vld [vmem:[%s3 + $0x60] sm:$0xff]
    %v990 = vld [vmem:[%s3 + $0x68] sm:$0xff]
    %v991 = vld [vmem:[%s3 + $0x70] sm:$0xff]
    %v992 = vld [vmem:[%s3 + $0x78] sm:$0xff]
    %v993 = vld [vmem:[%s2 + $0x2] sm:$0x1]
    %v995 = vlaneseq
    %v996 = vshrl.u32 %v995, 7
    %v997 = vsub.s32 0, %v996
    %v998 = vrot.slane %v993, %v997
    %1000 = vmatprep.subr.mxu0 0.0
    %v1001 = vand.u32 %v977, 4294901760
    %1002 = vmatpush1.msra.mxu0 %v1001
    %1003 = vmatprep.subr.mxu0 0.0
    %v1004 = vand.u32 %v978, 4294901760
    %1005 = vmatpush1.msra.mxu0 %v1004
    %1006 = vmatprep.subr.mxu0 0.0
    %v1007 = vand.u32 %v979, 4294901760
    %1008 = vmatpush1.msra.mxu0 %v1007
    %1009 = vmatprep.subr.mxu0 0.0
    %v1010 = vand.u32 %v980, 4294901760
    %1011 = vmatpush1.msra.mxu0 %v1010
    %1012 = vmatprep.subr.mxu0 0.0
    %v1013 = vand.u32 %v981, 4294901760
    %1014 = vmatpush1.msra.mxu0 %v1013
    %1015 = vmatprep.subr.mxu0 0.0
    %v1016 = vand.u32 %v982, 4294901760
    %1017 = vmatpush1.msra.mxu0 %v1016
    %1018 = vmatprep.subr.mxu0 0.0
    %v1019 = vand.u32 %v983, 4294901760
    %1020 = vmatpush1.msra.mxu0 %v1019
    %1021 = vmatprep.subr.mxu0 0.0
    %v1022 = vand.u32 %v984, 4294901760
    %1023 = vmatpush1.msra.mxu0 %v1022
    %1024 = vmatprep.subr.mxu0 0.0
    %v1025 = vand.u32 %v985, 4294901760
    %1026 = vmatpush1.msra.mxu0 %v1025
    %1027 = vmatprep.subr.mxu0 0.0
    %v1028 = vand.u32 %v986, 4294901760
    %1029 = vmatpush1.msra.mxu0 %v1028
    %1030 = vmatprep.subr.mxu0 0.0
    %v1031 = vand.u32 %v987, 4294901760
    %1032 = vmatpush1.msra.mxu0 %v1031
    %1033 = vmatprep.subr.mxu0 0.0
    %v1034 = vand.u32 %v988, 4294901760
    %1035 = vmatpush1.msra.mxu0 %v1034
    %1036 = vmatprep.subr.mxu0 0.0
    %v1037 = vand.u32 %v989, 4294901760
    %1038 = vmatpush1.msra.mxu0 %v1037
    %1039 = vmatprep.subr.mxu0 0.0
    %v1040 = vand.u32 %v990, 4294901760
    %1041 = vmatpush1.msra.mxu0 %v1040
    %1042 = vmatprep.subr.mxu0 0.0
    %v1043 = vand.u32 %v991, 4294901760
    %1044 = vmatpush1.msra.mxu0 %v1043
    %1045 = vmatprep.subr.mxu0 0.0
    %v1046 = vand.u32 %v992, 4294901760
    %1047 = vmatpush1.msra.mxu0 %v1046
    %1048 = vmatprep.subr.mxu0 0.0
    %1049 = vmatpush1.msra.mxu0 0.0
    %1050 = vmatprep.subr.mxu0 0.0
    %1051 = vmatpush1.msra.mxu0 0.0
    %1052 = vmatprep.subr.mxu0 0.0
    %1053 = vmatpush1.msra.mxu0 0.0
    %1054 = vmatprep.subr.mxu0 0.0
    %1055 = vmatpush1.msra.mxu0 0.0
    %1056 = vmatprep.subr.mxu0 0.0
    %1057 = vmatpush1.msra.mxu0 0.0
    %1058 = vmatprep.subr.mxu0 0.0
    %1059 = vmatpush1.msra.mxu0 0.0
    %1060 = vmatprep.subr.mxu0 0.0
    %1061 = vmatpush1.msra.mxu0 0.0
    %1062 = vmatprep.subr.mxu0 0.0
    %1063 = vmatpush1.msra.mxu0 0.0
    %1064 = vmatprep.subr.mxu0 0.0
    %1065 = vmatpush1.msra.mxu0 0.0
    %1066 = vmatprep.subr.mxu0 0.0
    %1067 = vmatpush1.msra.mxu0 0.0
    %1068 = vmatprep.subr.mxu0 0.0
    %1069 = vmatpush1.msra.mxu0 0.0
    %1070 = vmatprep.subr.mxu0 0.0
    %1071 = vmatpush1.msra.mxu0 0.0
    %1072 = vmatprep.subr.mxu0 0.0
    %1073 = vmatpush1.msra.mxu0 0.0
    %1074 = vmatprep.subr.mxu0 0.0
    %1075 = vmatpush1.msra.mxu0 0.0
    %1076 = vmatprep.subr.mxu0 0.0
    %1077 = vmatpush1.msra.mxu0 0.0
    %1078 = vmatprep.subr.mxu0 0.0
    %1079 = vmatpush1.msra.mxu0 0.0
    %1080 = vmatprep.mubr.f32.mxu0 0.0
    %v1081 = vand.u32 %v975, 4294901760
    %v1082 = vsub.f32 %v975, %v1081
    %v1083 = vand.u32 %v1082, 4294901760
    %v1084 = vsub.f32 %v1082, %v1083
    %v1085 = vand.u32 %v1084, 4294901760
    %1086 = vmatmul.mubr.f32.gmra.mrb[0].mxu0 %v1085
    %v1087 = vpop.f32.mrb[0].mxu0
    %v1088 = vadd.f32 %v998, %v1087
    %v1089 = vpop.f32.mrb[0].mxu0
    %1090 = vmatprep.mubr.f32.mxu0 0.0
    %v1091 = vand.u32 %v976, 4294901760
    %v1092 = vsub.f32 %v976, %v1091
    %v1093 = vand.u32 %v1092, 4294901760
    %v1094 = vsub.f32 %v1092, %v1093
    %v1095 = vand.u32 %v1094, 4294901760
    %1096 = vmatmul.mubr.f32.gmra.mrb[0].mxu0 %v1095
    %v1097 = vpop.f32.mrb[0].mxu0
    %v1098 = vadd.f32 %v998, %v1097
    %v1099 = vpop.f32.mrb[0].mxu0
    %1100 = vdwg.mxu0
    %1101 = vmatprep.subr.mxu0 0.0
    %v1102 = vand.u32 %v977, 4294901760
    %v1103 = vsub.f32 %v977, %v1102
    %v1104 = vand.u32 %v1103, 4294901760
    %v1105 = vsub.f32 %v1103, %v1104
    %v1106 = vand.u32 %v1105, 4294901760
    %1107 = vmatpush1.msra.mxu0 %v1106
    %1108 = vmatprep.subr.mxu0 0.0
    %v1109 = vand.u32 %v978, 4294901760
    %v1110 = vsub.f32 %v978, %v1109
    %v1111 = vand.u32 %v1110, 4294901760
    %v1112 = vsub.f32 %v1110, %v1111
    %v1113 = vand.u32 %v1112, 4294901760
    %1114 = vmatpush1.msra.mxu0 %v1113
    %1115 = vmatprep.subr.mxu0 0.0
    %v1116 = vand.u32 %v979, 4294901760
    %v1117 = vsub.f32 %v979, %v1116
    %v1118 = vand.u32 %v1117, 4294901760
    %v1119 = vsub.f32 %v1117, %v1118
    %v1120 = vand.u32 %v1119, 4294901760
    %1121 = vmatpush1.msra.mxu0 %v1120
    %1122 = vmatprep.subr.mxu0 0.0
    %v1123 = vand.u32 %v980, 4294901760
    %v1124 = vsub.f32 %v980, %v1123
    %v1125 = vand.u32 %v1124, 4294901760
    %v1126 = vsub.f32 %v1124, %v1125
    %v1127 = vand.u32 %v1126, 4294901760
    %1128 = vmatpush1.msra.mxu0 %v1127
    %1129 = vmatprep.subr.mxu0 0.0
    %v1130 = vand.u32 %v981, 4294901760
    %v1131 = vsub.f32 %v981, %v1130
    %v1132 = vand.u32 %v1131, 4294901760
    %v1133 = vsub.f32 %v1131, %v1132
    %v1134 = vand.u32 %v1133, 4294901760
    %1135 = vmatpush1.msra.mxu0 %v1134
    %1136 = vmatprep.subr.mxu0 0.0
    %v1137 = vand.u32 %v982, 4294901760
    %v1138 = vsub.f32 %v982, %v1137
    %v1139 = vand.u32 %v1138, 4294901760
    %v1140 = vsub.f32 %v1138, %v1139
    %v1141 = vand.u32 %v1140, 4294901760
    %1142 = vmatpush1.msra.mxu0 %v1141
    %1143 = vmatprep.subr.mxu0 0.0
    %v1144 = vand.u32 %v983, 4294901760
    %v1145 = vsub.f32 %v983, %v1144
    %v1146 = vand.u32 %v1145, 4294901760
    %v1147 = vsub.f32 %v1145, %v1146
    %v1148 = vand.u32 %v1147, 4294901760
    %1149 = vmatpush1.msra.mxu0 %v1148
    %1150 = vmatprep.subr.mxu0 0.0
    %v1151 = vand.u32 %v984, 4294901760
    %v1152 = vsub.f32 %v984, %v1151
    %v1153 = vand.u32 %v1152, 4294901760
    %v1154 = vsub.f32 %v1152, %v1153
    %v1155 = vand.u32 %v1154, 4294901760
    %1156 = vmatpush1.msra.mxu0 %v1155
    %1157 = vmatprep.subr.mxu0 0.0
    %v1158 = vand.u32 %v985, 4294901760
    %v1159 = vsub.f32 %v985, %v1158
    %v1160 = vand.u32 %v1159, 4294901760
    %v1161 = vsub.f32 %v1159, %v1160
    %v1162 = vand.u32 %v1161, 4294901760
    %1163 = vmatpush1.msra.mxu0 %v1162
    %1164 = vmatprep.subr.mxu0 0.0
    %v1165 = vand.u32 %v986, 4294901760
    %v1166 = vsub.f32 %v986, %v1165
    %v1167 = vand.u32 %v1166, 4294901760
    %v1168 = vsub.f32 %v1166, %v1167
    %v1169 = vand.u32 %v1168, 4294901760
    %1170 = vmatpush1.msra.mxu0 %v1169
    %1171 = vmatprep.subr.mxu0 0.0
    %v1172 = vand.u32 %v987, 4294901760
    %v1173 = vsub.f32 %v987, %v1172
    %v1174 = vand.u32 %v1173, 4294901760
    %v1175 = vsub.f32 %v1173, %v1174
    %v1176 = vand.u32 %v1175, 4294901760
    %1177 = vmatpush1.msra.mxu0 %v1176
    %1178 = vmatprep.subr.mxu0 0.0
    %v1179 = vand.u32 %v988, 4294901760
    %v1180 = vsub.f32 %v988, %v1179
    %v1181 = vand.u32 %v1180, 4294901760
    %v1182 = vsub.f32 %v1180, %v1181
    %v1183 = vand.u32 %v1182, 4294901760
    %1184 = vmatpush1.msra.mxu0 %v1183
    %1185 = vmatprep.subr.mxu0 0.0
    %v1186 = vand.u32 %v989, 4294901760
    %v1187 = vsub.f32 %v989, %v1186
    %v1188 = vand.u32 %v1187, 4294901760
    %v1189 = vsub.f32 %v1187, %v1188
    %v1190 = vand.u32 %v1189, 4294901760
    %1191 = vmatpush1.msra.mxu0 %v1190
    %1192 = vmatprep.subr.mxu0 0.0
    %v1193 = vand.u32 %v990, 4294901760
    %v1194 = vsub.f32 %v990, %v1193
    %v1195 = vand.u32 %v1194, 4294901760
    %v1196 = vsub.f32 %v1194, %v1195
    %v1197 = vand.u32 %v1196, 4294901760
    %1198 = vmatpush1.msra.mxu0 %v1197
    %1199 = vmatprep.subr.mxu0 0.0
    %v1200 = vand.u32 %v991, 4294901760
    %v1201 = vsub.f32 %v991, %v1200
    %v1202 = vand.u32 %v1201, 4294901760
    %v1203 = vsub.f32 %v1201, %v1202
    %v1204 = vand.u32 %v1203, 4294901760
    %1205 = vmatpush1.msra.mxu0 %v1204
    %1206 = vmatprep.subr.mxu0 0.0
    %v1207 = vand.u32 %v992, 4294901760
    %v1208 = vsub.f32 %v992, %v1207
    %v1209 = vand.u32 %v1208, 4294901760
    %v1210 = vsub.f32 %v1208, %v1209
    %v1211 = vand.u32 %v1210, 4294901760
    %1212 = vmatpush1.msra.mxu0 %v1211
    %1213 = vmatprep.subr.mxu0 0.0
    %1214 = vmatpush1.msra.mxu0 0.0
    %1215 = vmatprep.subr.mxu0 0.0
    %1216 = vmatpush1.msra.mxu0 0.0
    %1217 = vmatprep.subr.mxu0 0.0
    %1218 = vmatpush1.msra.mxu0 0.0
    %1219 = vmatprep.subr.mxu0 0.0
    %1220 = vmatpush1.msra.mxu0 0.0
    %1221 = vmatprep.subr.mxu0 0.0
    %1222 = vmatpush1.msra.mxu0 0.0
    %1223 = vmatprep.subr.mxu0 0.0
    %1224 = vmatpush1.msra.mxu0 0.0
    %1225 = vmatprep.subr.mxu0 0.0
    %1226 = vmatpush1.msra.mxu0 0.0
    %1227 = vmatprep.subr.mxu0 0.0
    %1228 = vmatpush1.msra.mxu0 0.0
    %1229 = vmatprep.subr.mxu0 0.0
    %1230 = vmatpush1.msra.mxu0 0.0
    %1231 = vmatprep.subr.mxu0 0.0
    %1232 = vmatpush1.msra.mxu0 0.0
    %1233 = vmatprep.subr.mxu0 0.0
    %1234 = vmatpush1.msra.mxu0 0.0
    %1235 = vmatprep.subr.mxu0 0.0
    %1236 = vmatpush1.msra.mxu0 0.0
    %1237 = vmatprep.subr.mxu0 0.0
    %1238 = vmatpush1.msra.mxu0 0.0
    %1239 = vmatprep.subr.mxu0 0.0
    %1240 = vmatpush1.msra.mxu0 0.0
    %1241 = vmatprep.subr.mxu0 0.0
    %1242 = vmatpush1.msra.mxu0 0.0
    %1243 = vmatprep.subr.mxu0 0.0
    %1244 = vmatpush1.msra.mxu0 0.0
    %1245 = vmatprep.mubr.f32.mxu0 0.0
    %v1246 = vand.u32 %v975, 4294901760
    %1247 = vmatmul.mubr.f32.gmra.mrb[0].mxu0 %v1246
    %v1248 = vpop.f32.mrb[0].mxu0
    %v1249 = vadd.f32 %v1088, %v1248
    %v1250 = vpop.f32.mrb[0].mxu0
    %1251 = vmatprep.mubr.f32.mxu0 0.0
    %v1252 = vand.u32 %v976, 4294901760
    %1253 = vmatmul.mubr.f32.gmra.mrb[0].mxu0 %v1252
    %v1254 = vpop.f32.mrb[0].mxu0
    %v1255 = vadd.f32 %v1098, %v1254
    %v1256 = vpop.f32.mrb[0].mxu0
    %1257 = vdwg.mxu0
    %1258 = vmatprep.subr.mxu0 0.0
    %v1259 = vand.u32 %v977, 4294901760
    %v1260 = vsub.f32 %v977, %v1259
    %1261 = vmatpush1.msra.mxu0 %v1260
    %1262 = vmatprep.subr.mxu0 0.0
    %v1263 = vand.u32 %v978, 4294901760
    %v1264 = vsub.f32 %v978, %v1263
    %1265 = vmatpush1.msra.mxu0 %v1264
    %1266 = vmatprep.subr.mxu0 0.0
    %v1267 = vand.u32 %v979, 4294901760
    %v1268 = vsub.f32 %v979, %v1267
    %1269 = vmatpush1.msra.mxu0 %v1268
    %1270 = vmatprep.subr.mxu0 0.0
    %v1271 = vand.u32 %v980, 4294901760
    %v1272 = vsub.f32 %v980, %v1271
    %1273 = vmatpush1.msra.mxu0 %v1272
    %1274 = vmatprep.subr.mxu0 0.0
    %v1275 = vand.u32 %v981, 4294901760
    %v1276 = vsub.f32 %v981, %v1275
    %1277 = vmatpush1.msra.mxu0 %v1276
    %1278 = vmatprep.subr.mxu0 0.0
    %v1279 = vand.u32 %v982, 4294901760
    %v1280 = vsub.f32 %v982, %v1279
    %1281 = vmatpush1.msra.mxu0 %v1280
    %1282 = vmatprep.subr.mxu0 0.0
    %v1283 = vand.u32 %v983, 4294901760
    %v1284 = vsub.f32 %v983, %v1283
    %1285 = vmatpush1.msra.mxu0 %v1284
    %1286 = vmatprep.subr.mxu0 0.0
    %v1287 = vand.u32 %v984, 4294901760
    %v1288 = vsub.f32 %v984, %v1287
    %1289 = vmatpush1.msra.mxu0 %v1288
    %1290 = vmatprep.subr.mxu0 0.0
    %v1291 = vand.u32 %v985, 4294901760
    %v1292 = vsub.f32 %v985, %v1291
    %1293 = vmatpush1.msra.mxu0 %v1292
    %1294 = vmatprep.subr.mxu0 0.0
    %v1295 = vand.u32 %v986, 4294901760
    %v1296 = vsub.f32 %v986, %v1295
    %1297 = vmatpush1.msra.mxu0 %v1296
    %1298 = vmatprep.subr.mxu0 0.0
    %v1299 = vand.u32 %v987, 4294901760
    %v1300 = vsub.f32 %v987, %v1299
    %1301 = vmatpush1.msra.mxu0 %v1300
    %1302 = vmatprep.subr.mxu0 0.0
    %v1303 = vand.u32 %v988, 4294901760
    %v1304 = vsub.f32 %v988, %v1303
    %1305 = vmatpush1.msra.mxu0 %v1304
    %1306 = vmatprep.subr.mxu0 0.0
    %v1307 = vand.u32 %v989, 4294901760
    %v1308 = vsub.f32 %v989, %v1307
    %1309 = vmatpush1.msra.mxu0 %v1308
    %1310 = vmatprep.subr.mxu0 0.0
    %v1311 = vand.u32 %v990, 4294901760
    %v1312 = vsub.f32 %v990, %v1311
    %1313 = vmatpush1.msra.mxu0 %v1312
    %1314 = vmatprep.subr.mxu0 0.0
    %v1315 = vand.u32 %v991, 4294901760
    %v1316 = vsub.f32 %v991, %v1315
    %1317 = vmatpush1.msra.mxu0 %v1316
    %1318 = vmatprep.subr.mxu0 0.0
    %v1319 = vand.u32 %v992, 4294901760
    %v1320 = vsub.f32 %v992, %v1319
    %1321 = vmatpush1.msra.mxu0 %v1320
    %1322 = vmatprep.subr.mxu0 0.0
    %1323 = vmatpush1.msra.mxu0 0.0
    %1324 = vmatprep.subr.mxu0 0.0
    %1325 = vmatpush1.msra.mxu0 0.0
    %1326 = vmatprep.subr.mxu0 0.0
    %1327 = vmatpush1.msra.mxu0 0.0
    %1328 = vmatprep.subr.mxu0 0.0
    %1329 = vmatpush1.msra.mxu0 0.0
    %1330 = vmatprep.subr.mxu0 0.0
    %1331 = vmatpush1.msra.mxu0 0.0
    %1332 = vmatprep.subr.mxu0 0.0
    %1333 = vmatpush1.msra.mxu0 0.0
    %1334 = vmatprep.subr.mxu0 0.0
    %1335 = vmatpush1.msra.mxu0 0.0
    %1336 = vmatprep.subr.mxu0 0.0
    %1337 = vmatpush1.msra.mxu0 0.0
    %1338 = vmatprep.subr.mxu0 0.0
    %1339 = vmatpush1.msra.mxu0 0.0
    %1340 = vmatprep.subr.mxu0 0.0
    %1341 = vmatpush1.msra.mxu0 0.0
    %1342 = vmatprep.subr.mxu0 0.0
    %1343 = vmatpush1.msra.mxu0 0.0
    %1344 = vmatprep.subr.mxu0 0.0
    %1345 = vmatpush1.msra.mxu0 0.0
    %1346 = vmatprep.subr.mxu0 0.0
    %1347 = vmatpush1.msra.mxu0 0.0
    %1348 = vmatprep.subr.mxu0 0.0
    %1349 = vmatpush1.msra.mxu0 0.0
    %1350 = vmatprep.subr.mxu0 0.0
    %1351 = vmatpush1.msra.mxu0 0.0
    %1352 = vmatprep.subr.mxu0 0.0
    %1353 = vmatpush1.msra.mxu0 0.0
    %1354 = vmatprep.mubr.f32.mxu0 0.0
    %v1355 = vand.u32 %v975, 4294901760
    %v1356 = vsub.f32 %v975, %v1355
    %1357 = vmatmul.mubr.f32.gmra.mrb[0].mxu0 %v1356
    %v1358 = vpop.f32.mrb[0].mxu0
    %v1359 = vadd.f32 %v1249, %v1358
    %v1360 = vpop.f32.mrb[0].mxu0
    %1361 = vmatprep.mubr.f32.mxu0 0.0
    %v1362 = vand.u32 %v976, 4294901760
    %v1363 = vsub.f32 %v976, %v1362
    %1364 = vmatmul.mubr.f32.gmra.mrb[0].mxu0 %v1363
    %v1365 = vpop.f32.mrb[0].mxu0
    %v1366 = vadd.f32 %v1255, %v1365
    %v1367 = vpop.f32.mrb[0].mxu0
    %1368 = vdwg.mxu0
    %1369 = vmatprep.subr.mxu0 0.0
    %v1370 = vand.u32 %v977, 4294901760
    %1371 = vmatpush1.msra.mxu0 %v1370
    %1372 = vmatprep.subr.mxu0 0.0
    %v1373 = vand.u32 %v978, 4294901760
    %1374 = vmatpush1.msra.mxu0 %v1373
    %1375 = vmatprep.subr.mxu0 0.0
    %v1376 = vand.u32 %v979, 4294901760
    %1377 = vmatpush1.msra.mxu0 %v1376
    %1378 = vmatprep.subr.mxu0 0.0
    %v1379 = vand.u32 %v980, 4294901760
    %1380 = vmatpush1.msra.mxu0 %v1379
    %1381 = vmatprep.subr.mxu0 0.0
    %v1382 = vand.u32 %v981, 4294901760
    %1383 = vmatpush1.msra.mxu0 %v1382
    %1384 = vmatprep.subr.mxu0 0.0
    %v1385 = vand.u32 %v982, 4294901760
    %1386 = vmatpush1.msra.mxu0 %v1385
    %1387 = vmatprep.subr.mxu0 0.0
    %v1388 = vand.u32 %v983, 4294901760
    %1389 = vmatpush1.msra.mxu0 %v1388
    %1390 = vmatprep.subr.mxu0 0.0
    %v1391 = vand.u32 %v984, 4294901760
    %1392 = vmatpush1.msra.mxu0 %v1391
    %1393 = vmatprep.subr.mxu0 0.0
    %v1394 = vand.u32 %v985, 4294901760
    %1395 = vmatpush1.msra.mxu0 %v1394
    %1396 = vmatprep.subr.mxu0 0.0
    %v1397 = vand.u32 %v986, 4294901760
    %1398 = vmatpush1.msra.mxu0 %v1397
    %1399 = vmatprep.subr.mxu0 0.0
    %v1400 = vand.u32 %v987, 4294901760
    %1401 = vmatpush1.msra.mxu0 %v1400
    %1402 = vmatprep.subr.mxu0 0.0
    %v1403 = vand.u32 %v988, 4294901760
    %1404 = vmatpush1.msra.mxu0 %v1403
    %1405 = vmatprep.subr.mxu0 0.0
    %v1406 = vand.u32 %v989, 4294901760
    %1407 = vmatpush1.msra.mxu0 %v1406
    %1408 = vmatprep.subr.mxu0 0.0
    %v1409 = vand.u32 %v990, 4294901760
    %1410 = vmatpush1.msra.mxu0 %v1409
    %1411 = vmatprep.subr.mxu0 0.0
    %v1412 = vand.u32 %v991, 4294901760
    %1413 = vmatpush1.msra.mxu0 %v1412
    %1414 = vmatprep.subr.mxu0 0.0
    %v1415 = vand.u32 %v992, 4294901760
    %1416 = vmatpush1.msra.mxu0 %v1415
    %1417 = vmatprep.subr.mxu0 0.0
    %1418 = vmatpush1.msra.mxu0 0.0
    %1419 = vmatprep.subr.mxu0 0.0
    %1420 = vmatpush1.msra.mxu0 0.0
    %1421 = vmatprep.subr.mxu0 0.0
    %1422 = vmatpush1.msra.mxu0 0.0
    %1423 = vmatprep.subr.mxu0 0.0
    %1424 = vmatpush1.msra.mxu0 0.0
    %1425 = vmatprep.subr.mxu0 0.0
    %1426 = vmatpush1.msra.mxu0 0.0
    %1427 = vmatprep.subr.mxu0 0.0
    %1428 = vmatpush1.msra.mxu0 0.0
    %1429 = vmatprep.subr.mxu0 0.0
    %1430 = vmatpush1.msra.mxu0 0.0
    %1431 = vmatprep.subr.mxu0 0.0
    %1432 = vmatpush1.msra.mxu0 0.0
    %1433 = vmatprep.subr.mxu0 0.0
    %1434 = vmatpush1.msra.mxu0 0.0
    %1435 = vmatprep.subr.mxu0 0.0
    %1436 = vmatpush1.msra.mxu0 0.0
    %1437 = vmatprep.subr.mxu0 0.0
    %1438 = vmatpush1.msra.mxu0 0.0
    %1439 = vmatprep.subr.mxu0 0.0
    %1440 = vmatpush1.msra.mxu0 0.0
    %1441 = vmatprep.subr.mxu0 0.0
    %1442 = vmatpush1.msra.mxu0 0.0
    %1443 = vmatprep.subr.mxu0 0.0
    %1444 = vmatpush1.msra.mxu0 0.0
    %1445 = vmatprep.subr.mxu0 0.0
    %1446 = vmatpush1.msra.mxu0 0.0
    %1447 = vmatprep.subr.mxu0 0.0
    %1448 = vmatpush1.msra.mxu0 0.0
    %1449 = vmatprep.mubr.f32.mxu0 0.0
    %v1450 = vand.u32 %v975, 4294901760
    %v1451 = vsub.f32 %v975, %v1450
    %v1452 = vand.u32 %v1451, 4294901760
    %1453 = vmatmul.mubr.f32.gmra.mrb[0].mxu0 %v1452
    %v1454 = vpop.f32.mrb[0].mxu0
    %v1455 = vadd.f32 %v1359, %v1454
    %v1456 = vpop.f32.mrb[0].mxu0
    %1457 = vmatprep.mubr.f32.mxu0 0.0
    %v1458 = vand.u32 %v976, 4294901760
    %v1459 = vsub.f32 %v976, %v1458
    %v1460 = vand.u32 %v1459, 4294901760
    %1461 = vmatmul.mubr.f32.gmra.mrb[0].mxu0 %v1460
    %v1462 = vpop.f32.mrb[0].mxu0
    %v1463 = vadd.f32 %v1366, %v1462
    %v1464 = vpop.f32.mrb[0].mxu0
    %1465 = vdwg.mxu0
    %1466 = vmatprep.subr.mxu0 0.0
    %v1467 = vand.u32 %v977, 4294901760
    %v1468 = vsub.f32 %v977, %v1467
    %v1469 = vand.u32 %v1468, 4294901760
    %1470 = vmatpush1.msra.mxu0 %v1469
    %1471 = vmatprep.subr.mxu0 0.0
    %v1472 = vand.u32 %v978, 4294901760
    %v1473 = vsub.f32 %v978, %v1472
    %v1474 = vand.u32 %v1473, 4294901760
    %1475 = vmatpush1.msra.mxu0 %v1474
    %1476 = vmatprep.subr.mxu0 0.0
    %v1477 = vand.u32 %v979, 4294901760
    %v1478 = vsub.f32 %v979, %v1477
    %v1479 = vand.u32 %v1478, 4294901760
    %1480 = vmatpush1.msra.mxu0 %v1479
    %1481 = vmatprep.subr.mxu0 0.0
    %v1482 = vand.u32 %v980, 4294901760
    %v1483 = vsub.f32 %v980, %v1482
    %v1484 = vand.u32 %v1483, 4294901760
    %1485 = vmatpush1.msra.mxu0 %v1484
    %1486 = vmatprep.subr.mxu0 0.0
    %v1487 = vand.u32 %v981, 4294901760
    %v1488 = vsub.f32 %v981, %v1487
    %v1489 = vand.u32 %v1488, 4294901760
    %1490 = vmatpush1.msra.mxu0 %v1489
    %1491 = vmatprep.subr.mxu0 0.0
    %v1492 = vand.u32 %v982, 4294901760
    %v1493 = vsub.f32 %v982, %v1492
    %v1494 = vand.u32 %v1493, 4294901760
    %1495 = vmatpush1.msra.mxu0 %v1494
    %1496 = vmatprep.subr.mxu0 0.0
    %v1497 = vand.u32 %v983, 4294901760
    %v1498 = vsub.f32 %v983, %v1497
    %v1499 = vand.u32 %v1498, 4294901760
    %1500 = vmatpush1.msra.mxu0 %v1499
    %1501 = vmatprep.subr.mxu0 0.0
    %v1502 = vand.u32 %v984, 4294901760
    %v1503 = vsub.f32 %v984, %v1502
    %v1504 = vand.u32 %v1503, 4294901760
    %1505 = vmatpush1.msra.mxu0 %v1504
    %1506 = vmatprep.subr.mxu0 0.0
    %v1507 = vand.u32 %v985, 4294901760
    %v1508 = vsub.f32 %v985, %v1507
    %v1509 = vand.u32 %v1508, 4294901760
    %1510 = vmatpush1.msra.mxu0 %v1509
    %1511 = vmatprep.subr.mxu0 0.0
    %v1512 = vand.u32 %v986, 4294901760
    %v1513 = vsub.f32 %v986, %v1512
    %v1514 = vand.u32 %v1513, 4294901760
    %1515 = vmatpush1.msra.mxu0 %v1514
    %1516 = vmatprep.subr.mxu0 0.0
    %v1517 = vand.u32 %v987, 4294901760
    %v1518 = vsub.f32 %v987, %v1517
    %v1519 = vand.u32 %v1518, 4294901760
    %1520 = vmatpush1.msra.mxu0 %v1519
    %1521 = vmatprep.subr.mxu0 0.0
    %v1522 = vand.u32 %v988, 4294901760
    %v1523 = vsub.f32 %v988, %v1522
    %v1524 = vand.u32 %v1523, 4294901760
    %1525 = vmatpush1.msra.mxu0 %v1524
    %1526 = vmatprep.subr.mxu0 0.0
    %v1527 = vand.u32 %v989, 4294901760
    %v1528 = vsub.f32 %v989, %v1527
    %v1529 = vand.u32 %v1528, 4294901760
    %1530 = vmatpush1.msra.mxu0 %v1529
    %1531 = vmatprep.subr.mxu0 0.0
    %v1532 = vand.u32 %v990, 4294901760
    %v1533 = vsub.f32 %v990, %v1532
    %v1534 = vand.u32 %v1533, 4294901760
    %1535 = vmatpush1.msra.mxu0 %v1534
    %1536 = vmatprep.subr.mxu0 0.0
    %v1537 = vand.u32 %v991, 4294901760
    %v1538 = vsub.f32 %v991, %v1537
    %v1539 = vand.u32 %v1538, 4294901760
    %1540 = vmatpush1.msra.mxu0 %v1539
    %1541 = vmatprep.subr.mxu0 0.0
    %v1542 = vand.u32 %v992, 4294901760
    %v1543 = vsub.f32 %v992, %v1542
    %v1544 = vand.u32 %v1543, 4294901760
    %1545 = vmatpush1.msra.mxu0 %v1544
    %1546 = vmatprep.subr.mxu0 0.0
    %1547 = vmatpush1.msra.mxu0 0.0
    %1548 = vmatprep.subr.mxu0 0.0
    %1549 = vmatpush1.msra.mxu0 0.0
    %1550 = vmatprep.subr.mxu0 0.0
    %1551 = vmatpush1.msra.mxu0 0.0
    %1552 = vmatprep.subr.mxu0 0.0
    %1553 = vmatpush1.msra.mxu0 0.0
    %1554 = vmatprep.subr.mxu0 0.0
    %1555 = vmatpush1.msra.mxu0 0.0
    %1556 = vmatprep.subr.mxu0 0.0
    %1557 = vmatpush1.msra.mxu0 0.0
    %1558 = vmatprep.subr.mxu0 0.0
    %1559 = vmatpush1.msra.mxu0 0.0
    %1560 = vmatprep.subr.mxu0 0.0
    %1561 = vmatpush1.msra.mxu0 0.0
    %1562 = vmatprep.subr.mxu0 0.0
    %1563 = vmatpush1.msra.mxu0 0.0
    %1564 = vmatprep.subr.mxu0 0.0
    %1565 = vmatpush1.msra.mxu0 0.0
    %1566 = vmatprep.subr.mxu0 0.0
    %1567 = vmatpush1.msra.mxu0 0.0
    %1568 = vmatprep.subr.mxu0 0.0
    %1569 = vmatpush1.msra.mxu0 0.0
    %1570 = vmatprep.subr.mxu0 0.0
    %1571 = vmatpush1.msra.mxu0 0.0
    %1572 = vmatprep.subr.mxu0 0.0
    %1573 = vmatpush1.msra.mxu0 0.0
    %1574 = vmatprep.subr.mxu0 0.0
    %1575 = vmatpush1.msra.mxu0 0.0
    %1576 = vmatprep.subr.mxu0 0.0
    %1577 = vmatpush1.msra.mxu0 0.0
    %1578 = vmatprep.mubr.f32.mxu0 0.0
    %v1579 = vand.u32 %v975, 4294901760
    %1580 = vmatmul.mubr.f32.gmra.mrb[0].mxu0 %v1579
    %v1581 = vpop.f32.mrb[0].mxu0
    %v1582 = vadd.f32 %v1455, %v1581
    %v1583 = vpop.f32.mrb[0].mxu0
    %1584 = vmatprep.mubr.f32.mxu0 0.0
    %v1585 = vand.u32 %v976, 4294901760
    %1586 = vmatmul.mubr.f32.gmra.mrb[0].mxu0 %v1585
    %v1587 = vpop.f32.mrb[0].mxu0
    %v1588 = vadd.f32 %v1463, %v1587
    %v1589 = vpop.f32.mrb[0].mxu0
    %1590 = vdwg.mxu0
    %1591 = vmatprep.subr.mxu0 0.0
    %v1592 = vand.u32 %v977, 4294901760
    %1593 = vmatpush1.msra.mxu0 %v1592
    %1594 = vmatprep.subr.mxu0 0.0
    %v1595 = vand.u32 %v978, 4294901760
    %1596 = vmatpush1.msra.mxu0 %v1595
    %1597 = vmatprep.subr.mxu0 0.0
    %v1598 = vand.u32 %v979, 4294901760
    %1599 = vmatpush1.msra.mxu0 %v1598
    %1600 = vmatprep.subr.mxu0 0.0
    %v1601 = vand.u32 %v980, 4294901760
    %1602 = vmatpush1.msra.mxu0 %v1601
    %1603 = vmatprep.subr.mxu0 0.0
    %v1604 = vand.u32 %v981, 4294901760
    %1605 = vmatpush1.msra.mxu0 %v1604
    %1606 = vmatprep.subr.mxu0 0.0
    %v1607 = vand.u32 %v982, 4294901760
    %1608 = vmatpush1.msra.mxu0 %v1607
    %1609 = vmatprep.subr.mxu0 0.0
    %v1610 = vand.u32 %v983, 4294901760
    %1611 = vmatpush1.msra.mxu0 %v1610
    %1612 = vmatprep.subr.mxu0 0.0
    %v1613 = vand.u32 %v984, 4294901760
    %1614 = vmatpush1.msra.mxu0 %v1613
    %1615 = vmatprep.subr.mxu0 0.0
    %v1616 = vand.u32 %v985, 4294901760
    %1617 = vmatpush1.msra.mxu0 %v1616
    %1618 = vmatprep.subr.mxu0 0.0
    %v1619 = vand.u32 %v986, 4294901760
    %1620 = vmatpush1.msra.mxu0 %v1619
    %1621 = vmatprep.subr.mxu0 0.0
    %v1622 = vand.u32 %v987, 4294901760
    %1623 = vmatpush1.msra.mxu0 %v1622
    %1624 = vmatprep.subr.mxu0 0.0
    %v1625 = vand.u32 %v988, 4294901760
    %1626 = vmatpush1.msra.mxu0 %v1625
    %1627 = vmatprep.subr.mxu0 0.0
    %v1628 = vand.u32 %v989, 4294901760
    %1629 = vmatpush1.msra.mxu0 %v1628
    %1630 = vmatprep.subr.mxu0 0.0
    %v1631 = vand.u32 %v990, 4294901760
    %1632 = vmatpush1.msra.mxu0 %v1631
    %1633 = vmatprep.subr.mxu0 0.0
    %v1634 = vand.u32 %v991, 4294901760
    %1635 = vmatpush1.msra.mxu0 %v1634
    %1636 = vmatprep.subr.mxu0 0.0
    %v1637 = vand.u32 %v992, 4294901760
    %1638 = vmatpush1.msra.mxu0 %v1637
    %1639 = vmatprep.subr.mxu0 0.0
    %1640 = vmatpush1.msra.mxu0 0.0
    %1641 = vmatprep.subr.mxu0 0.0
    %1642 = vmatpush1.msra.mxu0 0.0
    %1643 = vmatprep.subr.mxu0 0.0
    %1644 = vmatpush1.msra.mxu0 0.0
    %1645 = vmatprep.subr.mxu0 0.0
    %1646 = vmatpush1.msra.mxu0 0.0
    %1647 = vmatprep.subr.mxu0 0.0
    %1648 = vmatpush1.msra.mxu0 0.0
    %1649 = vmatprep.subr.mxu0 0.0
    %1650 = vmatpush1.msra.mxu0 0.0
    %1651 = vmatprep.subr.mxu0 0.0
    %1652 = vmatpush1.msra.mxu0 0.0
    %1653 = vmatprep.subr.mxu0 0.0
    %1654 = vmatpush1.msra.mxu0 0.0
    %1655 = vmatprep.subr.mxu0 0.0
    %1656 = vmatpush1.msra.mxu0 0.0
    %1657 = vmatprep.subr.mxu0 0.0
    %1658 = vmatpush1.msra.mxu0 0.0
    %1659 = vmatprep.subr.mxu0 0.0
    %1660 = vmatpush1.msra.mxu0 0.0
    %1661 = vmatprep.subr.mxu0 0.0
    %1662 = vmatpush1.msra.mxu0 0.0
    %1663 = vmatprep.subr.mxu0 0.0
    %1664 = vmatpush1.msra.mxu0 0.0
    %1665 = vmatprep.subr.mxu0 0.0
    %1666 = vmatpush1.msra.mxu0 0.0
    %1667 = vmatprep.subr.mxu0 0.0
    %1668 = vmatpush1.msra.mxu0 0.0
    %1669 = vmatprep.subr.mxu0 0.0
    %1670 = vmatpush1.msra.mxu0 0.0
    %1671 = vmatprep.mubr.f32.mxu0 0.0
    %v1672 = vand.u32 %v975, 4294901760
    %1673 = vmatmul.mubr.f32.gmra.mrb[0].mxu0 %v1672
    %v1674 = vpop.f32.mrb[0].mxu0
    %v1675 = vadd.f32 %v1582, %v1674
    %v1676 = vpop.f32.mrb[0].mxu0
    %1677 = vmatprep.mubr.f32.mxu0 0.0
    %v1678 = vand.u32 %v976, 4294901760
    %1679 = vmatmul.mubr.f32.gmra.mrb[0].mxu0 %v1678
    %v1680 = vpop.f32.mrb[0].mxu0
    %v1681 = vadd.f32 %v1588, %v1680
    %v1682 = vpop.f32.mrb[0].mxu0
    %1683 = vdwg.mxu0
    %vm1684 = vcmp.ge.f32.partialorder %v1675, 0.0
    %vm1685 = vcmp.ge.f32.partialorder %v1681, 0.0
    %v1686 = vmul.f32 %v1675, 0.01
    %v1687 = vmul.f32 %v1681, 0.01
    %v1688 = vsel %vm1684, %v1675, %v1686
    %v1689 = vsel %vm1685, %v1681, %v1687
    %v1690 = vld [vmem:[%s4] sm:$0xff]
    %v1691 = vld [vmem:[%s4 + $0x8] sm:$0xff]
    %v1692 = vld [vmem:[%s4 + $0x10] sm:$0xff]
    %v1693 = vld [vmem:[%s4 + $0x18] sm:$0xff]
    %v1694 = vld [vmem:[%s4 + $0x20] sm:$0xff]
    %v1695 = vld [vmem:[%s4 + $0x28] sm:$0xff]
    %v1696 = vld [vmem:[%s4 + $0x30] sm:$0xff]
    %v1697 = vld [vmem:[%s4 + $0x38] sm:$0xff]
    %v1698 = vld [vmem:[%s4 + $0x40] sm:$0xff]
    %v1699 = vld [vmem:[%s4 + $0x48] sm:$0xff]
    %v1700 = vld [vmem:[%s4 + $0x50] sm:$0xff]
    %v1701 = vld [vmem:[%s4 + $0x58] sm:$0xff]
    %v1702 = vld [vmem:[%s4 + $0x60] sm:$0xff]
    %v1703 = vld [vmem:[%s4 + $0x68] sm:$0xff]
    %v1704 = vld [vmem:[%s4 + $0x70] sm:$0xff]
    %v1705 = vld [vmem:[%s4 + $0x78] sm:$0xff]
    %v1706 = vld [vmem:[%s2 + $0x3] sm:$0x1]
    %v1708 = vlaneseq
    %v1709 = vshrl.u32 %v1708, 7
    %v1710 = vsub.s32 0, %v1709
    %v1711 = vrot.slane %v1706, %v1710
    %1713 = vmatprep.subr.mxu0 0.0
    %v1714 = vand.u32 %v1690, 4294901760
    %1715 = vmatpush1.msra.mxu0 %v1714
    %1716 = vmatprep.subr.mxu0 0.0
    %v1717 = vand.u32 %v1691, 4294901760
    %1718 = vmatpush1.msra.mxu0 %v1717
    %1719 = vmatprep.subr.mxu0 0.0
    %v1720 = vand.u32 %v1692, 4294901760
    %1721 = vmatpush1.msra.mxu0 %v1720
    %1722 = vmatprep.subr.mxu0 0.0
    %v1723 = vand.u32 %v1693, 4294901760
    %1724 = vmatpush1.msra.mxu0 %v1723
    %1725 = vmatprep.subr.mxu0 0.0
    %v1726 = vand.u32 %v1694, 4294901760
    %1727 = vmatpush1.msra.mxu0 %v1726
    %1728 = vmatprep.subr.mxu0 0.0
    %v1729 = vand.u32 %v1695, 4294901760
    %1730 = vmatpush1.msra.mxu0 %v1729
    %1731 = vmatprep.subr.mxu0 0.0
    %v1732 = vand.u32 %v1696, 4294901760
    %1733 = vmatpush1.msra.mxu0 %v1732
    %1734 = vmatprep.subr.mxu0 0.0
    %v1735 = vand.u32 %v1697, 4294901760
    %1736 = vmatpush1.msra.mxu0 %v1735
    %1737 = vmatprep.subr.mxu0 0.0
    %v1738 = vand.u32 %v1698, 4294901760
    %1739 = vmatpush1.msra.mxu0 %v1738
    %1740 = vmatprep.subr.mxu0 0.0
    %v1741 = vand.u32 %v1699, 4294901760
    %1742 = vmatpush1.msra.mxu0 %v1741
    %1743 = vmatprep.subr.mxu0 0.0
    %v1744 = vand.u32 %v1700, 4294901760
    %1745 = vmatpush1.msra.mxu0 %v1744
    %1746 = vmatprep.subr.mxu0 0.0
    %v1747 = vand.u32 %v1701, 4294901760
    %1748 = vmatpush1.msra.mxu0 %v1747
    %1749 = vmatprep.subr.mxu0 0.0
    %v1750 = vand.u32 %v1702, 4294901760
    %1751 = vmatpush1.msra.mxu0 %v1750
    %1752 = vmatprep.subr.mxu0 0.0
    %v1753 = vand.u32 %v1703, 4294901760
    %1754 = vmatpush1.msra.mxu0 %v1753
    %1755 = vmatprep.subr.mxu0 0.0
    %v1756 = vand.u32 %v1704, 4294901760
    %1757 = vmatpush1.msra.mxu0 %v1756
    %1758 = vmatprep.subr.mxu0 0.0
    %v1759 = vand.u32 %v1705, 4294901760
    %1760 = vmatpush1.msra.mxu0 %v1759
    %1761 = vmatprep.subr.mxu0 0.0
    %1762 = vmatpush1.msra.mxu0 0.0
    %1763 = vmatprep.subr.mxu0 0.0
    %1764 = vmatpush1.msra.mxu0 0.0
    %1765 = vmatprep.subr.mxu0 0.0
    %1766 = vmatpush1.msra.mxu0 0.0
    %1767 = vmatprep.subr.mxu0 0.0
    %1768 = vmatpush1.msra.mxu0 0.0
    %1769 = vmatprep.subr.mxu0 0.0
    %1770 = vmatpush1.msra.mxu0 0.0
    %1771 = vmatprep.subr.mxu0 0.0
    %1772 = vmatpush1.msra.mxu0 0.0
    %1773 = vmatprep.subr.mxu0 0.0
    %1774 = vmatpush1.msra.mxu0 0.0
    %1775 = vmatprep.subr.mxu0 0.0
    %1776 = vmatpush1.msra.mxu0 0.0
    %1777 = vmatprep.subr.mxu0 0.0
    %1778 = vmatpush1.msra.mxu0 0.0
    %1779 = vmatprep.subr.mxu0 0.0
    %1780 = vmatpush1.msra.mxu0 0.0
    %1781 = vmatprep.subr.mxu0 0.0
    %1782 = vmatpush1.msra.mxu0 0.0
    %1783 = vmatprep.subr.mxu0 0.0
    %1784 = vmatpush1.msra.mxu0 0.0
    %1785 = vmatprep.subr.mxu0 0.0
    %1786 = vmatpush1.msra.mxu0 0.0
    %1787 = vmatprep.subr.mxu0 0.0
    %1788 = vmatpush1.msra.mxu0 0.0
    %1789 = vmatprep.subr.mxu0 0.0
    %1790 = vmatpush1.msra.mxu0 0.0
    %1791 = vmatprep.subr.mxu0 0.0
    %1792 = vmatpush1.msra.mxu0 0.0
    %1793 = vmatprep.mubr.f32.mxu0 0.0
    %v1794 = vand.u32 %v1688, 4294901760
    %v1795 = vsub.f32 %v1688, %v1794
    %v1796 = vand.u32 %v1795, 4294901760
    %v1797 = vsub.f32 %v1795, %v1796
    %v1798 = vand.u32 %v1797, 4294901760
    %1799 = vmatmul.mubr.f32.gmra.mrb[0].mxu0 %v1798
    %v1800 = vpop.f32.mrb[0].mxu0
    %v1801 = vadd.f32 %v1711, %v1800
    %v1802 = vpop.f32.mrb[0].mxu0
    %1803 = vmatprep.mubr.f32.mxu0 0.0
    %v1804 = vand.u32 %v1689, 4294901760
    %v1805 = vsub.f32 %v1689, %v1804
    %v1806 = vand.u32 %v1805, 4294901760
    %v1807 = vsub.f32 %v1805, %v1806
    %v1808 = vand.u32 %v1807, 4294901760
    %1809 = vmatmul.mubr.f32.gmra.mrb[0].mxu0 %v1808
    %v1810 = vpop.f32.mrb[0].mxu0
    %v1811 = vadd.f32 %v1711, %v1810
    %v1812 = vpop.f32.mrb[0].mxu0
    %1813 = vdwg.mxu0
    %1814 = vmatprep.subr.mxu0 0.0
    %v1815 = vand.u32 %v1690, 4294901760
    %v1816 = vsub.f32 %v1690, %v1815
    %v1817 = vand.u32 %v1816, 4294901760
    %v1818 = vsub.f32 %v1816, %v1817
    %v1819 = vand.u32 %v1818, 4294901760
    %1820 = vmatpush1.msra.mxu0 %v1819
    %1821 = vmatprep.subr.mxu0 0.0
    %v1822 = vand.u32 %v1691, 4294901760
    %v1823 = vsub.f32 %v1691, %v1822
    %v1824 = vand.u32 %v1823, 4294901760
    %v1825 = vsub.f32 %v1823, %v1824
    %v1826 = vand.u32 %v1825, 4294901760
    %1827 = vmatpush1.msra.mxu0 %v1826
    %1828 = vmatprep.subr.mxu0 0.0
    %v1829 = vand.u32 %v1692, 4294901760
    %v1830 = vsub.f32 %v1692, %v1829
    %v1831 = vand.u32 %v1830, 4294901760
    %v1832 = vsub.f32 %v1830, %v1831
    %v1833 = vand.u32 %v1832, 4294901760
    %1834 = vmatpush1.msra.mxu0 %v1833
    %1835 = vmatprep.subr.mxu0 0.0
    %v1836 = vand.u32 %v1693, 4294901760
    %v1837 = vsub.f32 %v1693, %v1836
    %v1838 = vand.u32 %v1837, 4294901760
    %v1839 = vsub.f32 %v1837, %v1838
    %v1840 = vand.u32 %v1839, 4294901760
    %1841 = vmatpush1.msra.mxu0 %v1840
    %1842 = vmatprep.subr.mxu0 0.0
    %v1843 = vand.u32 %v1694, 4294901760
    %v1844 = vsub.f32 %v1694, %v1843
    %v1845 = vand.u32 %v1844, 4294901760
    %v1846 = vsub.f32 %v1844, %v1845
    %v1847 = vand.u32 %v1846, 4294901760
    %1848 = vmatpush1.msra.mxu0 %v1847
    %1849 = vmatprep.subr.mxu0 0.0
    %v1850 = vand.u32 %v1695, 4294901760
    %v1851 = vsub.f32 %v1695, %v1850
    %v1852 = vand.u32 %v1851, 4294901760
    %v1853 = vsub.f32 %v1851, %v1852
    %v1854 = vand.u32 %v1853, 4294901760
    %1855 = vmatpush1.msra.mxu0 %v1854
    %1856 = vmatprep.subr.mxu0 0.0
    %v1857 = vand.u32 %v1696, 4294901760
    %v1858 = vsub.f32 %v1696, %v1857
    %v1859 = vand.u32 %v1858, 4294901760
    %v1860 = vsub.f32 %v1858, %v1859
    %v1861 = vand.u32 %v1860, 4294901760
    %1862 = vmatpush1.msra.mxu0 %v1861
    %1863 = vmatprep.subr.mxu0 0.0
    %v1864 = vand.u32 %v1697, 4294901760
    %v1865 = vsub.f32 %v1697, %v1864
    %v1866 = vand.u32 %v1865, 4294901760
    %v1867 = vsub.f32 %v1865, %v1866
    %v1868 = vand.u32 %v1867, 4294901760
    %1869 = vmatpush1.msra.mxu0 %v1868
    %1870 = vmatprep.subr.mxu0 0.0
    %v1871 = vand.u32 %v1698, 4294901760
    %v1872 = vsub.f32 %v1698, %v1871
    %v1873 = vand.u32 %v1872, 4294901760
    %v1874 = vsub.f32 %v1872, %v1873
    %v1875 = vand.u32 %v1874, 4294901760
    %1876 = vmatpush1.msra.mxu0 %v1875
    %1877 = vmatprep.subr.mxu0 0.0
    %v1878 = vand.u32 %v1699, 4294901760
    %v1879 = vsub.f32 %v1699, %v1878
    %v1880 = vand.u32 %v1879, 4294901760
    %v1881 = vsub.f32 %v1879, %v1880
    %v1882 = vand.u32 %v1881, 4294901760
    %1883 = vmatpush1.msra.mxu0 %v1882
    %1884 = vmatprep.subr.mxu0 0.0
    %v1885 = vand.u32 %v1700, 4294901760
    %v1886 = vsub.f32 %v1700, %v1885
    %v1887 = vand.u32 %v1886, 4294901760
    %v1888 = vsub.f32 %v1886, %v1887
    %v1889 = vand.u32 %v1888, 4294901760
    %1890 = vmatpush1.msra.mxu0 %v1889
    %1891 = vmatprep.subr.mxu0 0.0
    %v1892 = vand.u32 %v1701, 4294901760
    %v1893 = vsub.f32 %v1701, %v1892
    %v1894 = vand.u32 %v1893, 4294901760
    %v1895 = vsub.f32 %v1893, %v1894
    %v1896 = vand.u32 %v1895, 4294901760
    %1897 = vmatpush1.msra.mxu0 %v1896
    %1898 = vmatprep.subr.mxu0 0.0
    %v1899 = vand.u32 %v1702, 4294901760
    %v1900 = vsub.f32 %v1702, %v1899
    %v1901 = vand.u32 %v1900, 4294901760
    %v1902 = vsub.f32 %v1900, %v1901
    %v1903 = vand.u32 %v1902, 4294901760
    %1904 = vmatpush1.msra.mxu0 %v1903
    %1905 = vmatprep.subr.mxu0 0.0
    %v1906 = vand.u32 %v1703, 4294901760
    %v1907 = vsub.f32 %v1703, %v1906
    %v1908 = vand.u32 %v1907, 4294901760
    %v1909 = vsub.f32 %v1907, %v1908
    %v1910 = vand.u32 %v1909, 4294901760
    %1911 = vmatpush1.msra.mxu0 %v1910
    %1912 = vmatprep.subr.mxu0 0.0
    %v1913 = vand.u32 %v1704, 4294901760
    %v1914 = vsub.f32 %v1704, %v1913
    %v1915 = vand.u32 %v1914, 4294901760
    %v1916 = vsub.f32 %v1914, %v1915
    %v1917 = vand.u32 %v1916, 4294901760
    %1918 = vmatpush1.msra.mxu0 %v1917
    %1919 = vmatprep.subr.mxu0 0.0
    %v1920 = vand.u32 %v1705, 4294901760
    %v1921 = vsub.f32 %v1705, %v1920
    %v1922 = vand.u32 %v1921, 4294901760
    %v1923 = vsub.f32 %v1921, %v1922
    %v1924 = vand.u32 %v1923, 4294901760
    %1925 = vmatpush1.msra.mxu0 %v1924
    %1926 = vmatprep.subr.mxu0 0.0
    %1927 = vmatpush1.msra.mxu0 0.0
    %1928 = vmatprep.subr.mxu0 0.0
    %1929 = vmatpush1.msra.mxu0 0.0
    %1930 = vmatprep.subr.mxu0 0.0
    %1931 = vmatpush1.msra.mxu0 0.0
    %1932 = vmatprep.subr.mxu0 0.0
    %1933 = vmatpush1.msra.mxu0 0.0
    %1934 = vmatprep.subr.mxu0 0.0
    %1935 = vmatpush1.msra.mxu0 0.0
    %1936 = vmatprep.subr.mxu0 0.0
    %1937 = vmatpush1.msra.mxu0 0.0
    %1938 = vmatprep.subr.mxu0 0.0
    %1939 = vmatpush1.msra.mxu0 0.0
    %1940 = vmatprep.subr.mxu0 0.0
    %1941 = vmatpush1.msra.mxu0 0.0
    %1942 = vmatprep.subr.mxu0 0.0
    %1943 = vmatpush1.msra.mxu0 0.0
    %1944 = vmatprep.subr.mxu0 0.0
    %1945 = vmatpush1.msra.mxu0 0.0
    %1946 = vmatprep.subr.mxu0 0.0
    %1947 = vmatpush1.msra.mxu0 0.0
    %1948 = vmatprep.subr.mxu0 0.0
    %1949 = vmatpush1.msra.mxu0 0.0
    %1950 = vmatprep.subr.mxu0 0.0
    %1951 = vmatpush1.msra.mxu0 0.0
    %1952 = vmatprep.subr.mxu0 0.0
    %1953 = vmatpush1.msra.mxu0 0.0
    %1954 = vmatprep.subr.mxu0 0.0
    %1955 = vmatpush1.msra.mxu0 0.0
    %1956 = vmatprep.subr.mxu0 0.0
    %1957 = vmatpush1.msra.mxu0 0.0
    %1958 = vmatprep.mubr.f32.mxu0 0.0
    %v1959 = vand.u32 %v1688, 4294901760
    %1960 = vmatmul.mubr.f32.gmra.mrb[0].mxu0 %v1959
    %v1961 = vpop.f32.mrb[0].mxu0
    %v1962 = vadd.f32 %v1801, %v1961
    %v1963 = vpop.f32.mrb[0].mxu0
    %1964 = vmatprep.mubr.f32.mxu0 0.0
    %v1965 = vand.u32 %v1689, 4294901760
    %1966 = vmatmul.mubr.f32.gmra.mrb[0].mxu0 %v1965
    %v1967 = vpop.f32.mrb[0].mxu0
    %v1968 = vadd.f32 %v1811, %v1967
    %v1969 = vpop.f32.mrb[0].mxu0
    %1970 = vdwg.mxu0
    %1971 = vmatprep.subr.mxu0 0.0
    %v1972 = vand.u32 %v1690, 4294901760
    %v1973 = vsub.f32 %v1690, %v1972
    %1974 = vmatpush1.msra.mxu0 %v1973
    %1975 = vmatprep.subr.mxu0 0.0
    %v1976 = vand.u32 %v1691, 4294901760
    %v1977 = vsub.f32 %v1691, %v1976
    %1978 = vmatpush1.msra.mxu0 %v1977
    %1979 = vmatprep.subr.mxu0 0.0
    %v1980 = vand.u32 %v1692, 4294901760
    %v1981 = vsub.f32 %v1692, %v1980
    %1982 = vmatpush1.msra.mxu0 %v1981
    %1983 = vmatprep.subr.mxu0 0.0
    %v1984 = vand.u32 %v1693, 4294901760
    %v1985 = vsub.f32 %v1693, %v1984
    %1986 = vmatpush1.msra.mxu0 %v1985
    %1987 = vmatprep.subr.mxu0 0.0
    %v1988 = vand.u32 %v1694, 4294901760
    %v1989 = vsub.f32 %v1694, %v1988
    %1990 = vmatpush1.msra.mxu0 %v1989
    %1991 = vmatprep.subr.mxu0 0.0
    %v1992 = vand.u32 %v1695, 4294901760
    %v1993 = vsub.f32 %v1695, %v1992
    %1994 = vmatpush1.msra.mxu0 %v1993
    %1995 = vmatprep.subr.mxu0 0.0
    %v1996 = vand.u32 %v1696, 4294901760
    %v1997 = vsub.f32 %v1696, %v1996
    %1998 = vmatpush1.msra.mxu0 %v1997
    %1999 = vmatprep.subr.mxu0 0.0
    %v2000 = vand.u32 %v1697, 4294901760
    %v2001 = vsub.f32 %v1697, %v2000
    %2002 = vmatpush1.msra.mxu0 %v2001
    %2003 = vmatprep.subr.mxu0 0.0
    %v2004 = vand.u32 %v1698, 4294901760
    %v2005 = vsub.f32 %v1698, %v2004
    %2006 = vmatpush1.msra.mxu0 %v2005
    %2007 = vmatprep.subr.mxu0 0.0
    %v2008 = vand.u32 %v1699, 4294901760
    %v2009 = vsub.f32 %v1699, %v2008
    %2010 = vmatpush1.msra.mxu0 %v2009
    %2011 = vmatprep.subr.mxu0 0.0
    %v2012 = vand.u32 %v1700, 4294901760
    %v2013 = vsub.f32 %v1700, %v2012
    %2014 = vmatpush1.msra.mxu0 %v2013
    %2015 = vmatprep.subr.mxu0 0.0
    %v2016 = vand.u32 %v1701, 4294901760
    %v2017 = vsub.f32 %v1701, %v2016
    %2018 = vmatpush1.msra.mxu0 %v2017
    %2019 = vmatprep.subr.mxu0 0.0
    %v2020 = vand.u32 %v1702, 4294901760
    %v2021 = vsub.f32 %v1702, %v2020
    %2022 = vmatpush1.msra.mxu0 %v2021
    %2023 = vmatprep.subr.mxu0 0.0
    %v2024 = vand.u32 %v1703, 4294901760
    %v2025 = vsub.f32 %v1703, %v2024
    %2026 = vmatpush1.msra.mxu0 %v2025
    %2027 = vmatprep.subr.mxu0 0.0
    %v2028 = vand.u32 %v1704, 4294901760
    %v2029 = vsub.f32 %v1704, %v2028
    %2030 = vmatpush1.msra.mxu0 %v2029
    %2031 = vmatprep.subr.mxu0 0.0
    %v2032 = vand.u32 %v1705, 4294901760
    %v2033 = vsub.f32 %v1705, %v2032
    %2034 = vmatpush1.msra.mxu0 %v2033
    %2035 = vmatprep.subr.mxu0 0.0
    %2036 = vmatpush1.msra.mxu0 0.0
    %2037 = vmatprep.subr.mxu0 0.0
    %2038 = vmatpush1.msra.mxu0 0.0
    %2039 = vmatprep.subr.mxu0 0.0
    %2040 = vmatpush1.msra.mxu0 0.0
    %2041 = vmatprep.subr.mxu0 0.0
    %2042 = vmatpush1.msra.mxu0 0.0
    %2043 = vmatprep.subr.mxu0 0.0
    %2044 = vmatpush1.msra.mxu0 0.0
    %2045 = vmatprep.subr.mxu0 0.0
    %2046 = vmatpush1.msra.mxu0 0.0
    %2047 = vmatprep.subr.mxu0 0.0
    %2048 = vmatpush1.msra.mxu0 0.0
    %2049 = vmatprep.subr.mxu0 0.0
    %2050 = vmatpush1.msra.mxu0 0.0
    %2051 = vmatprep.subr.mxu0 0.0
    %2052 = vmatpush1.msra.mxu0 0.0
    %2053 = vmatprep.subr.mxu0 0.0
    %2054 = vmatpush1.msra.mxu0 0.0
    %2055 = vmatprep.subr.mxu0 0.0
    %2056 = vmatpush1.msra.mxu0 0.0
    %2057 = vmatprep.subr.mxu0 0.0
    %2058 = vmatpush1.msra.mxu0 0.0
    %2059 = vmatprep.subr.mxu0 0.0
    %2060 = vmatpush1.msra.mxu0 0.0
    %2061 = vmatprep.subr.mxu0 0.0
    %2062 = vmatpush1.msra.mxu0 0.0
    %2063 = vmatprep.subr.mxu0 0.0
    %2064 = vmatpush1.msra.mxu0 0.0
    %2065 = vmatprep.subr.mxu0 0.0
    %2066 = vmatpush1.msra.mxu0 0.0
    %2067 = vmatprep.mubr.f32.mxu0 0.0
    %v2068 = vand.u32 %v1688, 4294901760
    %v2069 = vsub.f32 %v1688, %v2068
    %2070 = vmatmul.mubr.f32.gmra.mrb[0].mxu0 %v2069
    %v2071 = vpop.f32.mrb[0].mxu0
    %v2072 = vadd.f32 %v1962, %v2071
    %v2073 = vpop.f32.mrb[0].mxu0
    %2074 = vmatprep.mubr.f32.mxu0 0.0
    %v2075 = vand.u32 %v1689, 4294901760
    %v2076 = vsub.f32 %v1689, %v2075
    %2077 = vmatmul.mubr.f32.gmra.mrb[0].mxu0 %v2076
    %v2078 = vpop.f32.mrb[0].mxu0
    %v2079 = vadd.f32 %v1968, %v2078
    %v2080 = vpop.f32.mrb[0].mxu0
    %2081 = vdwg.mxu0
    %2082 = vmatprep.subr.mxu0 0.0
    %v2083 = vand.u32 %v1690, 4294901760
    %2084 = vmatpush1.msra.mxu0 %v2083
    %2085 = vmatprep.subr.mxu0 0.0
    %v2086 = vand.u32 %v1691, 4294901760
    %2087 = vmatpush1.msra.mxu0 %v2086
    %2088 = vmatprep.subr.mxu0 0.0
    %v2089 = vand.u32 %v1692, 4294901760
    %2090 = vmatpush1.msra.mxu0 %v2089
    %2091 = vmatprep.subr.mxu0 0.0
    %v2092 = vand.u32 %v1693, 4294901760
    %2093 = vmatpush1.msra.mxu0 %v2092
    %2094 = vmatprep.subr.mxu0 0.0
    %v2095 = vand.u32 %v1694, 4294901760
    %2096 = vmatpush1.msra.mxu0 %v2095
    %2097 = vmatprep.subr.mxu0 0.0
    %v2098 = vand.u32 %v1695, 4294901760
    %2099 = vmatpush1.msra.mxu0 %v2098
    %2100 = vmatprep.subr.mxu0 0.0
    %v2101 = vand.u32 %v1696, 4294901760
    %2102 = vmatpush1.msra.mxu0 %v2101
    %2103 = vmatprep.subr.mxu0 0.0
    %v2104 = vand.u32 %v1697, 4294901760
    %2105 = vmatpush1.msra.mxu0 %v2104
    %2106 = vmatprep.subr.mxu0 0.0
    %v2107 = vand.u32 %v1698, 4294901760
    %2108 = vmatpush1.msra.mxu0 %v2107
    %2109 = vmatprep.subr.mxu0 0.0
    %v2110 = vand.u32 %v1699, 4294901760
    %2111 = vmatpush1.msra.mxu0 %v2110
    %2112 = vmatprep.subr.mxu0 0.0
    %v2113 = vand.u32 %v1700, 4294901760
    %2114 = vmatpush1.msra.mxu0 %v2113
    %2115 = vmatprep.subr.mxu0 0.0
    %v2116 = vand.u32 %v1701, 4294901760
    %2117 = vmatpush1.msra.mxu0 %v2116
    %2118 = vmatprep.subr.mxu0 0.0
    %v2119 = vand.u32 %v1702, 4294901760
    %2120 = vmatpush1.msra.mxu0 %v2119
    %2121 = vmatprep.subr.mxu0 0.0
    %v2122 = vand.u32 %v1703, 4294901760
    %2123 = vmatpush1.msra.mxu0 %v2122
    %2124 = vmatprep.subr.mxu0 0.0
    %v2125 = vand.u32 %v1704, 4294901760
    %2126 = vmatpush1.msra.mxu0 %v2125
    %2127 = vmatprep.subr.mxu0 0.0
    %v2128 = vand.u32 %v1705, 4294901760
    %2129 = vmatpush1.msra.mxu0 %v2128
    %2130 = vmatprep.subr.mxu0 0.0
    %2131 = vmatpush1.msra.mxu0 0.0
    %2132 = vmatprep.subr.mxu0 0.0
    %2133 = vmatpush1.msra.mxu0 0.0
    %2134 = vmatprep.subr.mxu0 0.0
    %2135 = vmatpush1.msra.mxu0 0.0
    %2136 = vmatprep.subr.mxu0 0.0
    %2137 = vmatpush1.msra.mxu0 0.0
    %2138 = vmatprep.subr.mxu0 0.0
    %2139 = vmatpush1.msra.mxu0 0.0
    %2140 = vmatprep.subr.mxu0 0.0
    %2141 = vmatpush1.msra.mxu0 0.0
    %2142 = vmatprep.subr.mxu0 0.0
    %2143 = vmatpush1.msra.mxu0 0.0
    %2144 = vmatprep.subr.mxu0 0.0
    %2145 = vmatpush1.msra.mxu0 0.0
    %2146 = vmatprep.subr.mxu0 0.0
    %2147 = vmatpush1.msra.mxu0 0.0
    %2148 = vmatprep.subr.mxu0 0.0
    %2149 = vmatpush1.msra.mxu0 0.0
    %2150 = vmatprep.subr.mxu0 0.0
    %2151 = vmatpush1.msra.mxu0 0.0
    %2152 = vmatprep.subr.mxu0 0.0
    %2153 = vmatpush1.msra.mxu0 0.0
    %2154 = vmatprep.subr.mxu0 0.0
    %2155 = vmatpush1.msra.mxu0 0.0
    %2156 = vmatprep.subr.mxu0 0.0
    %2157 = vmatpush1.msra.mxu0 0.0
    %2158 = vmatprep.subr.mxu0 0.0
    %2159 = vmatpush1.msra.mxu0 0.0
    %2160 = vmatprep.subr.mxu0 0.0
    %2161 = vmatpush1.msra.mxu0 0.0
    %2162 = vmatprep.mubr.f32.mxu0 0.0
    %v2163 = vand.u32 %v1688, 4294901760
    %v2164 = vsub.f32 %v1688, %v2163
    %v2165 = vand.u32 %v2164, 4294901760
    %2166 = vmatmul.mubr.f32.gmra.mrb[0].mxu0 %v2165
    %v2167 = vpop.f32.mrb[0].mxu0
    %v2168 = vadd.f32 %v2072, %v2167
    %v2169 = vpop.f32.mrb[0].mxu0
    %2170 = vmatprep.mubr.f32.mxu0 0.0
    %v2171 = vand.u32 %v1689, 4294901760
    %v2172 = vsub.f32 %v1689, %v2171
    %v2173 = vand.u32 %v2172, 4294901760
    %2174 = vmatmul.mubr.f32.gmra.mrb[0].mxu0 %v2173
    %v2175 = vpop.f32.mrb[0].mxu0
    %v2176 = vadd.f32 %v2079, %v2175
    %v2177 = vpop.f32.mrb[0].mxu0
    %2178 = vdwg.mxu0
    %2179 = vmatprep.subr.mxu0 0.0
    %v2180 = vand.u32 %v1690, 4294901760
    %v2181 = vsub.f32 %v1690, %v2180
    %v2182 = vand.u32 %v2181, 4294901760
    %2183 = vmatpush1.msra.mxu0 %v2182
    %2184 = vmatprep.subr.mxu0 0.0
    %v2185 = vand.u32 %v1691, 4294901760
    %v2186 = vsub.f32 %v1691, %v2185
    %v2187 = vand.u32 %v2186, 4294901760
    %2188 = vmatpush1.msra.mxu0 %v2187
    %2189 = vmatprep.subr.mxu0 0.0
    %v2190 = vand.u32 %v1692, 4294901760
    %v2191 = vsub.f32 %v1692, %v2190
    %v2192 = vand.u32 %v2191, 4294901760
    %2193 = vmatpush1.msra.mxu0 %v2192
    %2194 = vmatprep.subr.mxu0 0.0
    %v2195 = vand.u32 %v1693, 4294901760
    %v2196 = vsub.f32 %v1693, %v2195
    %v2197 = vand.u32 %v2196, 4294901760
    %2198 = vmatpush1.msra.mxu0 %v2197
    %2199 = vmatprep.subr.mxu0 0.0
    %v2200 = vand.u32 %v1694, 4294901760
    %v2201 = vsub.f32 %v1694, %v2200
    %v2202 = vand.u32 %v2201, 4294901760
    %2203 = vmatpush1.msra.mxu0 %v2202
    %2204 = vmatprep.subr.mxu0 0.0
    %v2205 = vand.u32 %v1695, 4294901760
    %v2206 = vsub.f32 %v1695, %v2205
    %v2207 = vand.u32 %v2206, 4294901760
    %2208 = vmatpush1.msra.mxu0 %v2207
    %2209 = vmatprep.subr.mxu0 0.0
    %v2210 = vand.u32 %v1696, 4294901760
    %v2211 = vsub.f32 %v1696, %v2210
    %v2212 = vand.u32 %v2211, 4294901760
    %2213 = vmatpush1.msra.mxu0 %v2212
    %2214 = vmatprep.subr.mxu0 0.0
    %v2215 = vand.u32 %v1697, 4294901760
    %v2216 = vsub.f32 %v1697, %v2215
    %v2217 = vand.u32 %v2216, 4294901760
    %2218 = vmatpush1.msra.mxu0 %v2217
    %2219 = vmatprep.subr.mxu0 0.0
    %v2220 = vand.u32 %v1698, 4294901760
    %v2221 = vsub.f32 %v1698, %v2220
    %v2222 = vand.u32 %v2221, 4294901760
    %2223 = vmatpush1.msra.mxu0 %v2222
    %2224 = vmatprep.subr.mxu0 0.0
    %v2225 = vand.u32 %v1699, 4294901760
    %v2226 = vsub.f32 %v1699, %v2225
    %v2227 = vand.u32 %v2226, 4294901760
    %2228 = vmatpush1.msra.mxu0 %v2227
    %2229 = vmatprep.subr.mxu0 0.0
    %v2230 = vand.u32 %v1700, 4294901760
    %v2231 = vsub.f32 %v1700, %v2230
    %v2232 = vand.u32 %v2231, 4294901760
    %2233 = vmatpush1.msra.mxu0 %v2232
    %2234 = vmatprep.subr.mxu0 0.0
    %v2235 = vand.u32 %v1701, 4294901760
    %v2236 = vsub.f32 %v1701, %v2235
    %v2237 = vand.u32 %v2236, 4294901760
    %2238 = vmatpush1.msra.mxu0 %v2237
    %2239 = vmatprep.subr.mxu0 0.0
    %v2240 = vand.u32 %v1702, 4294901760
    %v2241 = vsub.f32 %v1702, %v2240
    %v2242 = vand.u32 %v2241, 4294901760
    %2243 = vmatpush1.msra.mxu0 %v2242
    %2244 = vmatprep.subr.mxu0 0.0
    %v2245 = vand.u32 %v1703, 4294901760
    %v2246 = vsub.f32 %v1703, %v2245
    %v2247 = vand.u32 %v2246, 4294901760
    %2248 = vmatpush1.msra.mxu0 %v2247
    %2249 = vmatprep.subr.mxu0 0.0
    %v2250 = vand.u32 %v1704, 4294901760
    %v2251 = vsub.f32 %v1704, %v2250
    %v2252 = vand.u32 %v2251, 4294901760
    %2253 = vmatpush1.msra.mxu0 %v2252
    %2254 = vmatprep.subr.mxu0 0.0
    %v2255 = vand.u32 %v1705, 4294901760
    %v2256 = vsub.f32 %v1705, %v2255
    %v2257 = vand.u32 %v2256, 4294901760
    %2258 = vmatpush1.msra.mxu0 %v2257
    %2259 = vmatprep.subr.mxu0 0.0
    %2260 = vmatpush1.msra.mxu0 0.0
    %2261 = vmatprep.subr.mxu0 0.0
    %2262 = vmatpush1.msra.mxu0 0.0
    %2263 = vmatprep.subr.mxu0 0.0
    %2264 = vmatpush1.msra.mxu0 0.0
    %2265 = vmatprep.subr.mxu0 0.0
    %2266 = vmatpush1.msra.mxu0 0.0
    %2267 = vmatprep.subr.mxu0 0.0
    %2268 = vmatpush1.msra.mxu0 0.0
    %2269 = vmatprep.subr.mxu0 0.0
    %2270 = vmatpush1.msra.mxu0 0.0
    %2271 = vmatprep.subr.mxu0 0.0
    %2272 = vmatpush1.msra.mxu0 0.0
    %2273 = vmatprep.subr.mxu0 0.0
    %2274 = vmatpush1.msra.mxu0 0.0
    %2275 = vmatprep.subr.mxu0 0.0
    %2276 = vmatpush1.msra.mxu0 0.0
    %2277 = vmatprep.subr.mxu0 0.0
    %2278 = vmatpush1.msra.mxu0 0.0
    %2279 = vmatprep.subr.mxu0 0.0
    %2280 = vmatpush1.msra.mxu0 0.0
    %2281 = vmatprep.subr.mxu0 0.0
    %2282 = vmatpush1.msra.mxu0 0.0
    %2283 = vmatprep.subr.mxu0 0.0
    %2284 = vmatpush1.msra.mxu0 0.0
    %2285 = vmatprep.subr.mxu0 0.0
    %2286 = vmatpush1.msra.mxu0 0.0
    %2287 = vmatprep.subr.mxu0 0.0
    %2288 = vmatpush1.msra.mxu0 0.0
    %2289 = vmatprep.subr.mxu0 0.0
    %2290 = vmatpush1.msra.mxu0 0.0
    %2291 = vmatprep.mubr.f32.mxu0 0.0
    %v2292 = vand.u32 %v1688, 4294901760
    %2293 = vmatmul.mubr.f32.gmra.mrb[0].mxu0 %v2292
    %v2294 = vpop.f32.mrb[0].mxu0
    %v2295 = vadd.f32 %v2168, %v2294
    %v2296 = vpop.f32.mrb[0].mxu0
    %2297 = vmatprep.mubr.f32.mxu0 0.0
    %v2298 = vand.u32 %v1689, 4294901760
    %2299 = vmatmul.mubr.f32.gmra.mrb[0].mxu0 %v2298
    %v2300 = vpop.f32.mrb[0].mxu0
    %v2301 = vadd.f32 %v2176, %v2300
    %v2302 = vpop.f32.mrb[0].mxu0
    %2303 = vdwg.mxu0
    %2304 = vmatprep.subr.mxu0 0.0
    %v2305 = vand.u32 %v1690, 4294901760
    %2306 = vmatpush1.msra.mxu0 %v2305
    %2307 = vmatprep.subr.mxu0 0.0
    %v2308 = vand.u32 %v1691, 4294901760
    %2309 = vmatpush1.msra.mxu0 %v2308
    %2310 = vmatprep.subr.mxu0 0.0
    %v2311 = vand.u32 %v1692, 4294901760
    %2312 = vmatpush1.msra.mxu0 %v2311
    %2313 = vmatprep.subr.mxu0 0.0
    %v2314 = vand.u32 %v1693, 4294901760
    %2315 = vmatpush1.msra.mxu0 %v2314
    %2316 = vmatprep.subr.mxu0 0.0
    %v2317 = vand.u32 %v1694, 4294901760
    %2318 = vmatpush1.msra.mxu0 %v2317
    %2319 = vmatprep.subr.mxu0 0.0
    %v2320 = vand.u32 %v1695, 4294901760
    %2321 = vmatpush1.msra.mxu0 %v2320
    %2322 = vmatprep.subr.mxu0 0.0
    %v2323 = vand.u32 %v1696, 4294901760
    %2324 = vmatpush1.msra.mxu0 %v2323
    %2325 = vmatprep.subr.mxu0 0.0
    %v2326 = vand.u32 %v1697, 4294901760
    %2327 = vmatpush1.msra.mxu0 %v2326
    %2328 = vmatprep.subr.mxu0 0.0
    %v2329 = vand.u32 %v1698, 4294901760
    %2330 = vmatpush1.msra.mxu0 %v2329
    %2331 = vmatprep.subr.mxu0 0.0
    %v2332 = vand.u32 %v1699, 4294901760
    %2333 = vmatpush1.msra.mxu0 %v2332
    %2334 = vmatprep.subr.mxu0 0.0
    %v2335 = vand.u32 %v1700, 4294901760
    %2336 = vmatpush1.msra.mxu0 %v2335
    %2337 = vmatprep.subr.mxu0 0.0
    %v2338 = vand.u32 %v1701, 4294901760
    %2339 = vmatpush1.msra.mxu0 %v2338
    %2340 = vmatprep.subr.mxu0 0.0
    %v2341 = vand.u32 %v1702, 4294901760
    %2342 = vmatpush1.msra.mxu0 %v2341
    %2343 = vmatprep.subr.mxu0 0.0
    %v2344 = vand.u32 %v1703, 4294901760
    %2345 = vmatpush1.msra.mxu0 %v2344
    %2346 = vmatprep.subr.mxu0 0.0
    %v2347 = vand.u32 %v1704, 4294901760
    %2348 = vmatpush1.msra.mxu0 %v2347
    %2349 = vmatprep.subr.mxu0 0.0
    %v2350 = vand.u32 %v1705, 4294901760
    %2351 = vmatpush1.msra.mxu0 %v2350
    %2352 = vmatprep.subr.mxu0 0.0
    %2353 = vmatpush1.msra.mxu0 0.0
    %2354 = vmatprep.subr.mxu0 0.0
    %2355 = vmatpush1.msra.mxu0 0.0
    %2356 = vmatprep.subr.mxu0 0.0
    %2357 = vmatpush1.msra.mxu0 0.0
    %2358 = vmatprep.subr.mxu0 0.0
    %2359 = vmatpush1.msra.mxu0 0.0
    %2360 = vmatprep.subr.mxu0 0.0
    %2361 = vmatpush1.msra.mxu0 0.0
    %2362 = vmatprep.subr.mxu0 0.0
    %2363 = vmatpush1.msra.mxu0 0.0
    %2364 = vmatprep.subr.mxu0 0.0
    %2365 = vmatpush1.msra.mxu0 0.0
    %2366 = vmatprep.subr.mxu0 0.0
    %2367 = vmatpush1.msra.mxu0 0.0
    %2368 = vmatprep.subr.mxu0 0.0
    %2369 = vmatpush1.msra.mxu0 0.0
    %2370 = vmatprep.subr.mxu0 0.0
    %2371 = vmatpush1.msra.mxu0 0.0
    %2372 = vmatprep.subr.mxu0 0.0
    %2373 = vmatpush1.msra.mxu0 0.0
    %2374 = vmatprep.subr.mxu0 0.0
    %2375 = vmatpush1.msra.mxu0 0.0
    %2376 = vmatprep.subr.mxu0 0.0
    %2377 = vmatpush1.msra.mxu0 0.0
    %2378 = vmatprep.subr.mxu0 0.0
    %2379 = vmatpush1.msra.mxu0 0.0
    %2380 = vmatprep.subr.mxu0 0.0
    %2381 = vmatpush1.msra.mxu0 0.0
    %2382 = vmatprep.subr.mxu0 0.0
    %2383 = vmatpush1.msra.mxu0 0.0
    %2384 = vmatprep.mubr.f32.mxu0 0.0
    %v2385 = vand.u32 %v1688, 4294901760
    %2386 = vmatmul.mubr.f32.gmra.mrb[0].mxu0 %v2385
    %v2387 = vpop.f32.mrb[0].mxu0
    %v2388 = vadd.f32 %v2295, %v2387
    %v2389 = vpop.f32.mrb[0].mxu0
    %2390 = vmatprep.mubr.f32.mxu0 0.0
    %v2391 = vand.u32 %v1689, 4294901760
    %2392 = vmatmul.mubr.f32.gmra.mrb[0].mxu0 %v2391
    %v2393 = vpop.f32.mrb[0].mxu0
    %v2394 = vadd.f32 %v2301, %v2393
    %v2395 = vpop.f32.mrb[0].mxu0
    %2396 = vdwg.mxu0
    %vm2397 = vcmp.ge.f32.partialorder %v2388, 0.0
    %vm2398 = vcmp.ge.f32.partialorder %v2394, 0.0
    %v2399 = vmul.f32 %v2388, 0.01
    %v2400 = vmul.f32 %v2394, 0.01
    %v2401 = vsel %vm2397, %v2388, %v2399
    %v2402 = vsel %vm2398, %v2394, %v2400
    %v2403 = vadd.f32 %v2401, %v962
    %v2404 = vadd.f32 %v2402, %v969
    %2405 = vst [vmem:[#allocation2] sm:$0xff] %v2403
    %2406 = vst [vmem:[#allocation2 + $0x8] sm:$0xff] %v2404
    // Predicated region
    $region22: #{ff_forward.1} parent=1 // pred_check
      _
    $region23: #{ff_forward.1} parent=1 // pred_check_branch
      %2408 = sbr.rel (0) target = $region25
    $region24: #{ff_forward.1} parent=1 // pred_region
      %s2410 = ssub.s32 256, 128
      %2411 = vsyncadd [#allocation3], %s2410
      %s2412 = sshll.u32 [#allocation2], 4
      %s2413 = int_to_ptr.vmem [resolvable:$true] %s2412
      %2418 = dma.vmem_to_hbm [thread:$0]  %s2413, 128, %s5, [#allocation3], 128, 128, 8
    $region25: #{ff_forward.1} parent=1 // pred_fallthru
      _
    // Predicated region
    $region26: #{ff_forward.1} parent=1 // pred_check
      _
    $region27: #{ff_forward.1} parent=1 // pred_check_branch
      %2420 = sbr.rel (0) target = $region29
    $region28: #{ff_forward.1} parent=1 // pred_region
      %2421 = dma.done [#allocation3], 256
    $region29: #{ff_forward.1} parent=1 // pred_fallthru
      _
    %2422 = vsyncpa [#allocation3], 1

</llo_original>
